<compile_context>
chip_gen: v5e
topology: v5e:2x2
jax: 0.10.0
libtpu: 0.0.40
codegen_flags: <defaults>
</compile_context>

<pallas_src>
import functools

import jax
import jax.numpy as jnp
import numpy as np
from jax import lax
from jax.experimental import pallas as pl
from jax.experimental.pallas import tpu as pltpu


def lstm_kernel(x_ref, wih1_ref, whh1_ref, b1_ref, w2_ref, b2_ref,
                wlin_ref, blin_ref, out_ref):
    T, B, _ = x_ref.shape
    total = out_ref.shape[0]
    H = whh1_ref.shape[0]
    future = total - T

    # Hoist all loop-invariant weight loads out of the recurrence.
    wih1 = wih1_ref[...]      # (1, 4H)   cell-1 input weights (input_size = 1)
    whh1 = whh1_ref[...]      # (H, 4H)
    b1 = b1_ref[...]          # (1, 4H)   bias_ih + bias_hh folded
    w2 = w2_ref[...]          # (2H, 4H)  fused [wih2; whh2]
    b2 = b2_ref[...]          # (1, 4H)
    wlin = wlin_ref[...]      # (1, H)
    blin = blin_ref[...]      # (1, 1)

    def gates_to_hc(gates, c):
        # Packed gate order (i, f, o, g): one sigmoid over the contiguous
        # (B, 3H) block, one tanh over the last H lanes (2 EUP pushes/cell).
        ifo = jax.nn.sigmoid(gates[:, :3 * H])
        g = jnp.tanh(gates[:, 3 * H:])
        i = ifo[:, 0 * H:1 * H]
        f = ifo[:, 1 * H:2 * H]
        o = ifo[:, 2 * H:3 * H]
        c_new = f * c + i * g
        h_new = o * jnp.tanh(c_new)
        return h_new, c_new

    def recur(inp, h1, c1, h2, c2):
        # Cell 1: K=1 input term on the VPU (broadcast outer product) plus one
        # lane-dense (H, 4H) MXU matmul.
        g1 = (inp * wih1
              + jnp.dot(h1, whh1, preferred_element_type=jnp.float32)
              + b1)                                             # (B, 4H)
        h1n, c1n = gates_to_hc(g1, c1)

        # Cell 2: single fused (2H, 4H) MXU matmul on [h1_new, h2].
        hcat = jnp.concatenate([h1n, h2], axis=-1)              # (B, 2H)
        g2 = jnp.dot(hcat, w2, preferred_element_type=jnp.float32) + b2
        h2n, c2n = gates_to_hc(g2, c2)

        # Linear head: VPU multiply + lane reduction (no N=1 MXU push).
        out = jnp.sum(h2n * wlin, axis=-1, keepdims=True) + blin  # (B, 1)
        return h1n, c1n, h2n, c2n, out

    def obs_step(t, carry):
        h1, c1, h2, c2, _ = carry
        h1, c1, h2, c2, out = recur(x_ref[t], h1, c1, h2, c2)   # dynamic row read
        out_ref[t] = out                                        # per-step VMEM store
        return (h1, c1, h2, c2, out)

    def fut_step(k, carry):
        h1, c1, h2, c2, prev = carry
        h1, c1, h2, c2, out = recur(prev, h1, c1, h2, c2)
        out_ref[T + k] = out
        return (h1, c1, h2, c2, out)

    zeros_bh = jnp.zeros((B, H), jnp.float32)
    init = (zeros_bh, zeros_bh, zeros_bh, zeros_bh,
            jnp.zeros((B, 1), jnp.float32))

    # Cap the unroll so long sequences don't blow up the instruction stream.
    carry = lax.fori_loop(0, T, obs_step, init,
                          unroll=True if T <= 32 else 8)
    if future > 0:
        lax.fori_loop(0, future, fut_step, carry,
                      unroll=True if future <= 32 else 8)


def _repack_gate_weight(w):
    """torch layout (4H, in) with gate rows (i, f, g, o) -> (in, 4H) packed (i, f, o, g)."""
    wi, wf, wg, wo = jnp.split(w, 4, axis=0)
    return jnp.concatenate([wi, wf, wo, wg], axis=0).T


def _repack_gate_bias(b_ih, b_hh):
    b = b_ih + b_hh
    bi, bf, bg, bo = jnp.split(b, 4)
    return jnp.concatenate([bi, bf, bo, bg])[None, :]           # (1, 4H)


@functools.partial(jax.jit, static_argnames=("future",))
def lstm_predictor(x, params, future=0):
    """x: (B, T) float32. Returns (B, T + future) float32."""
    B, T = x.shape
    total = T + future

    # Wrapper-side weight repacking (fused under jit).
    wih1 = _repack_gate_weight(params["w_ih1"])                 # (1, 4H)
    whh1 = _repack_gate_weight(params["w_hh1"])                 # (H, 4H)
    b1 = _repack_gate_bias(params["b_ih1"], params["b_hh1"])    # (1, 4H)
    wih2 = _repack_gate_weight(params["w_ih2"])                 # (H, 4H)
    whh2 = _repack_gate_weight(params["w_hh2"])                 # (H, 4H)
    w2 = jnp.concatenate([wih2, whh2], axis=0)                  # (2H, 4H) fused cell-2
    b2 = _repack_gate_bias(params["b_ih2"], params["b_hh2"])    # (1, 4H)
    wlin = params["w_lin"]                                      # (1, H)
    blin = params["b_lin"].reshape(1, 1)                        # (1, 1)

    # Layout plumbing: time-major (T, B, 1) so the kernel reads x_ref[t] per step.
    x_tb1 = x.astype(jnp.float32).T[:, :, None]

    vmem = pl.BlockSpec(memory_space=pltpu.MemorySpace.VMEM)
    out_tb1 = pl.pallas_call(
        lstm_kernel,
        out_shape=jax.ShapeDtypeStruct((total, B, 1), jnp.float32),
        in_specs=[vmem] * 8,
        out_specs=vmem,
    )(x_tb1, wih1, whh1, b1, w2, b2, wlin, blin)

    return out_tb1[:, :, 0].T                                   # (B, T + future)


# ----------------------------- reference (pure JAX) -------------------------

def _ref_cell(inp, h, c, w_ih, w_hh, b_ih, b_hh, H):
    gates = inp @ w_ih.T + h @ w_hh.T + b_ih + b_hh             # torch (i, f, g, o)
    i = jax.nn.sigmoid(gates[:, 0 * H:1 * H])
    f = jax.nn.sigmoid(gates[:, 1 * H:2 * H])
    g = jnp.tanh(gates[:, 2 * H:3 * H])
    o = jax.nn.sigmoid(gates[:, 3 * H:4 * H])
    c_new = f * c + i * g
    h_new = o * jnp.tanh(c_new)
    return h_new, c_new


def lstm_predictor_ref(x, params, future=0):
    B, T = x.shape
    H = params["w_hh1"].shape[1]
    h1 = jnp.zeros((B, H), jnp.float32)
    c1 = jnp.zeros((B, H), jnp.float32)
    h2 = jnp.zeros((B, H), jnp.float32)
    c2 = jnp.zeros((B, H), jnp.float32)
    outs = []
    out = jnp.zeros((B, 1), jnp.float32)
    for t in range(T):
        inp = x[:, t:t + 1]
        h1, c1 = _ref_cell(inp, h1, c1, params["w_ih1"], params["w_hh1"],
                           params["b_ih1"], params["b_hh1"], H)
        h2, c2 = _ref_cell(h1, h2, c2, params["w_ih2"], params["w_hh2"],
                           params["b_ih2"], params["b_hh2"], H)
        out = h2 @ params["w_lin"].T + params["b_lin"]
        outs.append(out)
    for _ in range(future):
        h1, c1 = _ref_cell(out, h1, c1, params["w_ih1"], params["w_hh1"],
                           params["b_ih1"], params["b_hh1"], H)
        h2, c2 = _ref_cell(h1, h2, c2, params["w_ih2"], params["w_hh2"],
                           params["b_ih2"], params["b_hh2"], H)
        out = h2 @ params["w_lin"].T + params["b_lin"]
        outs.append(out)
    return jnp.concatenate(outs, axis=1)


# ----------------------------------- main -----------------------------------

def make_params(key, n_hidden):
    """PyTorch-convention LSTMCell / Linear parameters."""
    H = n_hidden
    ks = jax.random.split(key, 10)
    bound = 1.0 / np.sqrt(H)
    u = lambda k, shape: jax.random.uniform(k, shape, jnp.float32, -bound, bound)
    return {
        "w_ih1": u(ks[0], (4 * H, 1)),
        "w_hh1": u(ks[1], (4 * H, H)),
        "b_ih1": u(ks[2], (4 * H,)),
        "b_hh1": u(ks[3], (4 * H,)),
        "w_ih2": u(ks[4], (4 * H, H)),
        "w_hh2": u(ks[5], (4 * H, H)),
        "b_ih2": u(ks[6], (4 * H,)),
        "b_hh2": u(ks[7], (4 * H,)),
        "w_lin": u(ks[8], (1, H)),
        "b_lin": u(ks[9], (1,)),
    }


if __name__ == "__main__":
    key = jax.random.PRNGKey(0)
    k_x, k_p = jax.random.split(key)

    B, T, H, FUTURE = 2, 8, 32, 3
    x = jax.random.normal(k_x, (B, T), jnp.float32)
    params = make_params(k_p, H)

    out = jax.block_until_ready(lstm_predictor(x, params, future=FUTURE))
    ref = jax.block_until_ready(lstm_predictor_ref(x, params, future=FUTURE))

    assert out.shape == (B, T + FUTURE), out.shape
    np.testing.assert_allclose(np.asarray(out), np.asarray(ref),
                               rtol=1e-5, atol=1e-5)
    print("KERNEL_OK")
</pallas_src>

<mosaic_0001>
module attributes {stable_mosaic.version = 11 : i64} {
  func.func @lstm_kernel(%arg0: memref<8x2x1xf32, #tpu.memory_space<vmem>>, %arg1: memref<1x128xf32, #tpu.memory_space<vmem>>, %arg2: memref<32x128xf32, #tpu.memory_space<vmem>>, %arg3: memref<1x128xf32, #tpu.memory_space<vmem>>, %arg4: memref<64x128xf32, #tpu.memory_space<vmem>>, %arg5: memref<1x128xf32, #tpu.memory_space<vmem>>, %arg6: memref<1x32xf32, #tpu.memory_space<vmem>>, %arg7: memref<1x1xf32, #tpu.memory_space<vmem>>, %arg8: memref<11x2x1xf32, #tpu.memory_space<vmem>>) attributes {dimension_semantics = [], scalar_prefetch = 0 : i64, scratch_operands = 0 : i64, tpu.core_type = #tpu.core_type<tc>} {
    %c0 = arith.constant 0 : index
    %c0_0 = arith.constant 0 : index
    %0 = vector.load %arg1[%c0, %c0_0] : memref<1x128xf32, #tpu.memory_space<vmem>>, vector<1x128xf32>
    %c0_1 = arith.constant 0 : index
    %c0_2 = arith.constant 0 : index
    %1 = vector.load %arg2[%c0_1, %c0_2] : memref<32x128xf32, #tpu.memory_space<vmem>>, vector<32x128xf32>
    %c0_3 = arith.constant 0 : index
    %c0_4 = arith.constant 0 : index
    %2 = vector.load %arg3[%c0_3, %c0_4] : memref<1x128xf32, #tpu.memory_space<vmem>>, vector<1x128xf32>
    %c0_5 = arith.constant 0 : index
    %c0_6 = arith.constant 0 : index
    %3 = vector.load %arg4[%c0_5, %c0_6] : memref<64x128xf32, #tpu.memory_space<vmem>>, vector<64x128xf32>
    %c0_7 = arith.constant 0 : index
    %c0_8 = arith.constant 0 : index
    %4 = vector.load %arg5[%c0_7, %c0_8] : memref<1x128xf32, #tpu.memory_space<vmem>>, vector<1x128xf32>
    %c0_9 = arith.constant 0 : index
    %c0_10 = arith.constant 0 : index
    %5 = vector.load %arg6[%c0_9, %c0_10] : memref<1x32xf32, #tpu.memory_space<vmem>>, vector<1x32xf32>
    %c0_11 = arith.constant 0 : index
    %c0_12 = arith.constant 0 : index
    %6 = vector.load %arg7[%c0_11, %c0_12] : memref<1x1xf32, #tpu.memory_space<vmem>>, vector<1x1xf32>
    %cst = arith.constant 0.000000e+00 : f32
    %7 = vector.broadcast %cst : f32 to vector<2x32xf32>
    %cst_13 = arith.constant 0.000000e+00 : f32
    %8 = vector.broadcast %cst_13 : f32 to vector<2x1xf32>
    %c0_i32 = arith.constant 0 : i32
    %9 = arith.index_cast %c0_i32 : i32 to index
    %c0_14 = arith.constant 0 : index
    %c0_15 = arith.constant 0 : index
    %10 = vector.load %arg0[%9, %c0_14, %c0_15] : memref<8x2x1xf32, #tpu.memory_space<vmem>>, vector<1x2x1xf32>
    %11 = vector.shape_cast %10 : vector<1x2x1xf32> to vector<2x1xf32>
    %12 = vector.broadcast %11 : vector<2x1xf32> to vector<2x128xf32>
    %13 = vector.broadcast %0 : vector<1x128xf32> to vector<2x128xf32>
    %14 = arith.mulf %12, %13 : vector<2x128xf32>
    %cst_16 = arith.constant dense<0.000000e+00> : vector<2x128xf32>
    %15 = tpu.matmul %7, %1, %cst_16 {dimension_numbers = #tpu.dot_dimension_numbers<[1], [0], [0], [1], [0, 0, 1, 1], [], []>} : vector<2x32xf32>, vector<32x128xf32>, vector<2x128xf32> -> vector<2x128xf32>
    %16 = arith.addf %14, %15 : vector<2x128xf32>
    %17 = vector.broadcast %2 : vector<1x128xf32> to vector<2x128xf32>
    %18 = arith.addf %16, %17 : vector<2x128xf32>
    %19 = vector.extract_strided_slice %18 {offsets = [0, 0], sizes = [2, 96], strides = [1, 1]} : vector<2x128xf32> to vector<2x96xf32>
    %20 = arith.negf %19 : vector<2x96xf32>
    %21 = math.exp %20 : vector<2x96xf32>
    %cst_17 = arith.constant 1.000000e+00 : f32
    %22 = vector.broadcast %cst_17 : f32 to vector<2x96xf32>
    %23 = arith.addf %22, %21 : vector<2x96xf32>
    %24 = arith.divf %22, %23 : vector<2x96xf32>
    %25 = vector.extract_strided_slice %18 {offsets = [0, 96], sizes = [2, 32], strides = [1, 1]} : vector<2x128xf32> to vector<2x32xf32>
    %26 = math.tanh %25 : vector<2x32xf32>
    %27 = vector.extract_strided_slice %24 {offsets = [0, 0], sizes = [2, 32], strides = [1, 1]} : vector<2x96xf32> to vector<2x32xf32>
    %28 = vector.extract_strided_slice %24 {offsets = [0, 32], sizes = [2, 32], strides = [1, 1]} : vector<2x96xf32> to vector<2x32xf32>
    %29 = vector.extract_strided_slice %24 {offsets = [0, 64], sizes = [2, 32], strides = [1, 1]} : vector<2x96xf32> to vector<2x32xf32>
    %30 = arith.mulf %28, %7 : vector<2x32xf32>
    %31 = arith.mulf %27, %26 : vector<2x32xf32>
    %32 = arith.addf %30, %31 : vector<2x32xf32>
    %33 = math.tanh %32 : vector<2x32xf32>
    %34 = arith.mulf %29, %33 : vector<2x32xf32>
    %35 = tpu.concatenate %34, %7 in 1 : vector<2x32xf32>, vector<2x32xf32> -> vector<2x64xf32>
    %cst_18 = arith.constant dense<0.000000e+00> : vector<2x128xf32>
    %36 = tpu.matmul %35, %3, %cst_18 {dimension_numbers = #tpu.dot_dimension_numbers<[1], [0], [0], [1], [0, 0, 1, 1], [], []>} : vector<2x64xf32>, vector<64x128xf32>, vector<2x128xf32> -> vector<2x128xf32>
    %37 = vector.broadcast %4 : vector<1x128xf32> to vector<2x128xf32>
    %38 = arith.addf %36, %37 : vector<2x128xf32>
    %39 = vector.extract_strided_slice %38 {offsets = [0, 0], sizes = [2, 96], strides = [1, 1]} : vector<2x128xf32> to vector<2x96xf32>
    %40 = arith.negf %39 : vector<2x96xf32>
    %41 = math.exp %40 : vector<2x96xf32>
    %cst_19 = arith.constant 1.000000e+00 : f32
    %42 = vector.broadcast %cst_19 : f32 to vector<2x96xf32>
    %43 = arith.addf %42, %41 : vector<2x96xf32>
    %44 = arith.divf %42, %43 : vector<2x96xf32>
    %45 = vector.extract_strided_slice %38 {offsets = [0, 96], sizes = [2, 32], strides = [1, 1]} : vector<2x128xf32> to vector<2x32xf32>
    %46 = math.tanh %45 : vector<2x32xf32>
    %47 = vector.extract_strided_slice %44 {offsets = [0, 0], sizes = [2, 32], strides = [1, 1]} : vector<2x96xf32> to vector<2x32xf32>
    %48 = vector.extract_strided_slice %44 {offsets = [0, 32], sizes = [2, 32], strides = [1, 1]} : vector<2x96xf32> to vector<2x32xf32>
    %49 = vector.extract_strided_slice %44 {offsets = [0, 64], sizes = [2, 32], strides = [1, 1]} : vector<2x96xf32> to vector<2x32xf32>
    %50 = arith.mulf %48, %7 : vector<2x32xf32>
    %51 = arith.mulf %47, %46 : vector<2x32xf32>
    %52 = arith.addf %50, %51 : vector<2x32xf32>
    %53 = math.tanh %52 : vector<2x32xf32>
    %54 = arith.mulf %49, %53 : vector<2x32xf32>
    %55 = vector.broadcast %5 : vector<1x32xf32> to vector<2x32xf32>
    %56 = arith.mulf %54, %55 : vector<2x32xf32>
    %cst_20 = arith.constant dense<0.000000e+00> : vector<2xf32>
    %57 = vector.multi_reduction <add>, %56, %cst_20 [1] : vector<2x32xf32> to vector<2xf32>
    %58 = vector.shape_cast %57 : vector<2xf32> to vector<2x1xf32>
    %59 = vector.broadcast %6 : vector<1x1xf32> to vector<2x1xf32>
    %60 = arith.addf %58, %59 : vector<2x1xf32>
    %61 = arith.index_cast %c0_i32 : i32 to index
    %c0_21 = arith.constant 0 : index
    %c0_22 = arith.constant 0 : index
    %62 = vector.load %arg8[%61, %c0_21, %c0_22] : memref<11x2x1xf32, #tpu.memory_space<vmem>>, vector<1x2x1xf32>
    %63 = vector.shape_cast %62 : vector<1x2x1xf32> to vector<2x1xf32>
    %64 = vector.shape_cast %60 : vector<2x1xf32> to vector<1x2x1xf32>
    tpu.vector_store %arg8[%61, %c0_21, %c0_22], %64 {strides = array<i32>} : memref<11x2x1xf32, #tpu.memory_space<vmem>>, vector<1x2x1xf32>,
    %c1_i32 = arith.constant 1 : i32
    %65 = arith.index_cast %c1_i32 : i32 to index
    %c0_23 = arith.constant 0 : index
    %c0_24 = arith.constant 0 : index
    %66 = vector.load %arg0[%65, %c0_23, %c0_24] : memref<8x2x1xf32, #tpu.memory_space<vmem>>, vector<1x2x1xf32>
    %67 = vector.shape_cast %66 : vector<1x2x1xf32> to vector<2x1xf32>
    %68 = vector.broadcast %67 : vector<2x1xf32> to vector<2x128xf32>
    %69 = vector.broadcast %0 : vector<1x128xf32> to vector<2x128xf32>
    %70 = arith.mulf %68, %69 : vector<2x128xf32>
    %cst_25 = arith.constant dense<0.000000e+00> : vector<2x128xf32>
    %71 = tpu.matmul %34, %1, %cst_25 {dimension_numbers = #tpu.dot_dimension_numbers<[1], [0], [0], [1], [0, 0, 1, 1], [], []>} : vector<2x32xf32>, vector<32x128xf32>, vector<2x128xf32> -> vector<2x128xf32>
    %72 = arith.addf %70, %71 : vector<2x128xf32>
    %73 = vector.broadcast %2 : vector<1x128xf32> to vector<2x128xf32>
    %74 = arith.addf %72, %73 : vector<2x128xf32>
    %75 = vector.extract_strided_slice %74 {offsets = [0, 0], sizes = [2, 96], strides = [1, 1]} : vector<2x128xf32> to vector<2x96xf32>
    %76 = arith.negf %75 : vector<2x96xf32>
    %77 = math.exp %76 : vector<2x96xf32>
    %cst_26 = arith.constant 1.000000e+00 : f32
    %78 = vector.broadcast %cst_26 : f32 to vector<2x96xf32>
    %79 = arith.addf %78, %77 : vector<2x96xf32>
    %80 = arith.divf %78, %79 : vector<2x96xf32>
    %81 = vector.extract_strided_slice %74 {offsets = [0, 96], sizes = [2, 32], strides = [1, 1]} : vector<2x128xf32> to vector<2x32xf32>
    %82 = math.tanh %81 : vector<2x32xf32>
    %83 = vector.extract_strided_slice %80 {offsets = [0, 0], sizes = [2, 32], strides = [1, 1]} : vector<2x96xf32> to vector<2x32xf32>
    %84 = vector.extract_strided_slice %80 {offsets = [0, 32], sizes = [2, 32], strides = [1, 1]} : vector<2x96xf32> to vector<2x32xf32>
    %85 = vector.extract_strided_slice %80 {offsets = [0, 64], sizes = [2, 32], strides = [1, 1]} : vector<2x96xf32> to vector<2x32xf32>
    %86 = arith.mulf %84, %32 : vector<2x32xf32>
    %87 = arith.mulf %83, %82 : vector<2x32xf32>
    %88 = arith.addf %86, %87 : vector<2x32xf32>
    %89 = math.tanh %88 : vector<2x32xf32>
    %90 = arith.mulf %85, %89 : vector<2x32xf32>
    %91 = tpu.concatenate %90, %54 in 1 : vector<2x32xf32>, vector<2x32xf32> -> vector<2x64xf32>
    %cst_27 = arith.constant dense<0.000000e+00> : vector<2x128xf32>
    %92 = tpu.matmul %91, %3, %cst_27 {dimension_numbers = #tpu.dot_dimension_numbers<[1], [0], [0], [1], [0, 0, 1, 1], [], []>} : vector<2x64xf32>, vector<64x128xf32>, vector<2x128xf32> -> vector<2x128xf32>
    %93 = vector.broadcast %4 : vector<1x128xf32> to vector<2x128xf32>
    %94 = arith.addf %92, %93 : vector<2x128xf32>
    %95 = vector.extract_strided_slice %94 {offsets = [0, 0], sizes = [2, 96], strides = [1, 1]} : vector<2x128xf32> to vector<2x96xf32>
    %96 = arith.negf %95 : vector<2x96xf32>
    %97 = math.exp %96 : vector<2x96xf32>
    %cst_28 = arith.constant 1.000000e+00 : f32
    %98 = vector.broadcast %cst_28 : f32 to vector<2x96xf32>
    %99 = arith.addf %98, %97 : vector<2x96xf32>
    %100 = arith.divf %98, %99 : vector<2x96xf32>
    %101 = vector.extract_strided_slice %94 {offsets = [0, 96], sizes = [2, 32], strides = [1, 1]} : vector<2x128xf32> to vector<2x32xf32>
    %102 = math.tanh %101 : vector<2x32xf32>
    %103 = vector.extract_strided_slice %100 {offsets = [0, 0], sizes = [2, 32], strides = [1, 1]} : vector<2x96xf32> to vector<2x32xf32>
    %104 = vector.extract_strided_slice %100 {offsets = [0, 32], sizes = [2, 32], strides = [1, 1]} : vector<2x96xf32> to vector<2x32xf32>
    %105 = vector.extract_strided_slice %100 {offsets = [0, 64], sizes = [2, 32], strides = [1, 1]} : vector<2x96xf32> to vector<2x32xf32>
    %106 = arith.mulf %104, %52 : vector<2x32xf32>
    %107 = arith.mulf %103, %102 : vector<2x32xf32>
    %108 = arith.addf %106, %107 : vector<2x32xf32>
    %109 = math.tanh %108 : vector<2x32xf32>
    %110 = arith.mulf %105, %109 : vector<2x32xf32>
    %111 = vector.broadcast %5 : vector<1x32xf32> to vector<2x32xf32>
    %112 = arith.mulf %110, %111 : vector<2x32xf32>
    %cst_29 = arith.constant dense<0.000000e+00> : vector<2xf32>
    %113 = vector.multi_reduction <add>, %112, %cst_29 [1] : vector<2x32xf32> to vector<2xf32>
    %114 = vector.shape_cast %113 : vector<2xf32> to vector<2x1xf32>
    %115 = vector.broadcast %6 : vector<1x1xf32> to vector<2x1xf32>
    %116 = arith.addf %114, %115 : vector<2x1xf32>
    %117 = arith.index_cast %c1_i32 : i32 to index
    %c0_30 = arith.constant 0 : index
    %c0_31 = arith.constant 0 : index
    %118 = vector.load %arg8[%117, %c0_30, %c0_31] : memref<11x2x1xf32, #tpu.memory_space<vmem>>, vector<1x2x1xf32>
    %119 = vector.shape_cast %118 : vector<1x2x1xf32> to vector<2x1xf32>
    %120 = vector.shape_cast %116 : vector<2x1xf32> to vector<1x2x1xf32>
    tpu.vector_store %arg8[%117, %c0_30, %c0_31], %120 {strides = array<i32>} : memref<11x2x1xf32, #tpu.memory_space<vmem>>, vector<1x2x1xf32>,
    %c2_i32 = arith.constant 2 : i32
    %121 = arith.index_cast %c2_i32 : i32 to index
    %c0_32 = arith.constant 0 : index
    %c0_33 = arith.constant 0 : index
    %122 = vector.load %arg0[%121, %c0_32, %c0_33] : memref<8x2x1xf32, #tpu.memory_space<vmem>>, vector<1x2x1xf32>
    %123 = vector.shape_cast %122 : vector<1x2x1xf32> to vector<2x1xf32>
    %124 = vector.broadcast %123 : vector<2x1xf32> to vector<2x128xf32>
    %125 = vector.broadcast %0 : vector<1x128xf32> to vector<2x128xf32>
    %126 = arith.mulf %124, %125 : vector<2x128xf32>
    %cst_34 = arith.constant dense<0.000000e+00> : vector<2x128xf32>
    %127 = tpu.matmul %90, %1, %cst_34 {dimension_numbers = #tpu.dot_dimension_numbers<[1], [0], [0], [1], [0, 0, 1, 1], [], []>} : vector<2x32xf32>, vector<32x128xf32>, vector<2x128xf32> -> vector<2x128xf32>
    %128 = arith.addf %126, %127 : vector<2x128xf32>
    %129 = vector.broadcast %2 : vector<1x128xf32> to vector<2x128xf32>
    %130 = arith.addf %128, %129 : vector<2x128xf32>
    %131 = vector.extract_strided_slice %130 {offsets = [0, 0], sizes = [2, 96], strides = [1, 1]} : vector<2x128xf32> to vector<2x96xf32>
    %132 = arith.negf %131 : vector<2x96xf32>
    %133 = math.exp %132 : vector<2x96xf32>
    %cst_35 = arith.constant 1.000000e+00 : f32
    %134 = vector.broadcast %cst_35 : f32 to vector<2x96xf32>
    %135 = arith.addf %134, %133 : vector<2x96xf32>
    %136 = arith.divf %134, %135 : vector<2x96xf32>
    %137 = vector.extract_strided_slice %130 {offsets = [0, 96], sizes = [2, 32], strides = [1, 1]} : vector<2x128xf32> to vector<2x32xf32>
    %138 = math.tanh %137 : vector<2x32xf32>
    %139 = vector.extract_strided_slice %136 {offsets = [0, 0], sizes = [2, 32], strides = [1, 1]} : vector<2x96xf32> to vector<2x32xf32>
    %140 = vector.extract_strided_slice %136 {offsets = [0, 32], sizes = [2, 32], strides = [1, 1]} : vector<2x96xf32> to vector<2x32xf32>
    %141 = vector.extract_strided_slice %136 {offsets = [0, 64], sizes = [2, 32], strides = [1, 1]} : vector<2x96xf32> to vector<2x32xf32>
    %142 = arith.mulf %140, %88 : vector<2x32xf32>
    %143 = arith.mulf %139, %138 : vector<2x32xf32>
    %144 = arith.addf %142, %143 : vector<2x32xf32>
    %145 = math.tanh %144 : vector<2x32xf32>
    %146 = arith.mulf %141, %145 : vector<2x32xf32>
    %147 = tpu.concatenate %146, %110 in 1 : vector<2x32xf32>, vector<2x32xf32> -> vector<2x64xf32>
    %cst_36 = arith.constant dense<0.000000e+00> : vector<2x128xf32>
    %148 = tpu.matmul %147, %3, %cst_36 {dimension_numbers = #tpu.dot_dimension_numbers<[1], [0], [0], [1], [0, 0, 1, 1], [], []>} : vector<2x64xf32>, vector<64x128xf32>, vector<2x128xf32> -> vector<2x128xf32>
    %149 = vector.broadcast %4 : vector<1x128xf32> to vector<2x128xf32>
    %150 = arith.addf %148, %149 : vector<2x128xf32>
    %151 = vector.extract_strided_slice %150 {offsets = [0, 0], sizes = [2, 96], strides = [1, 1]} : vector<2x128xf32> to vector<2x96xf32>
    %152 = arith.negf %151 : vector<2x96xf32>
    %153 = math.exp %152 : vector<2x96xf32>
    %cst_37 = arith.constant 1.000000e+00 : f32
    %154 = vector.broadcast %cst_37 : f32 to vector<2x96xf32>
    %155 = arith.addf %154, %153 : vector<2x96xf32>
    %156 = arith.divf %154, %155 : vector<2x96xf32>
    %157 = vector.extract_strided_slice %150 {offsets = [0, 96], sizes = [2, 32], strides = [1, 1]} : vector<2x128xf32> to vector<2x32xf32>
    %158 = math.tanh %157 : vector<2x32xf32>
    %159 = vector.extract_strided_slice %156 {offsets = [0, 0], sizes = [2, 32], strides = [1, 1]} : vector<2x96xf32> to vector<2x32xf32>
    %160 = vector.extract_strided_slice %156 {offsets = [0, 32], sizes = [2, 32], strides = [1, 1]} : vector<2x96xf32> to vector<2x32xf32>
    %161 = vector.extract_strided_slice %156 {offsets = [0, 64], sizes = [2, 32], strides = [1, 1]} : vector<2x96xf32> to vector<2x32xf32>
    %162 = arith.mulf %160, %108 : vector<2x32xf32>
    %163 = arith.mulf %159, %158 : vector<2x32xf32>
    %164 = arith.addf %162, %163 : vector<2x32xf32>
    %165 = math.tanh %164 : vector<2x32xf32>
    %166 = arith.mulf %161, %165 : vector<2x32xf32>
    %167 = vector.broadcast %5 : vector<1x32xf32> to vector<2x32xf32>
    %168 = arith.mulf %166, %167 : vector<2x32xf32>
    %cst_38 = arith.constant dense<0.000000e+00> : vector<2xf32>
    %169 = vector.multi_reduction <add>, %168, %cst_38 [1] : vector<2x32xf32> to vector<2xf32>
    %170 = vector.shape_cast %169 : vector<2xf32> to vector<2x1xf32>
    %171 = vector.broadcast %6 : vector<1x1xf32> to vector<2x1xf32>
    %172 = arith.addf %170, %171 : vector<2x1xf32>
    %173 = arith.index_cast %c2_i32 : i32 to index
    %c0_39 = arith.constant 0 : index
    %c0_40 = arith.constant 0 : index
    %174 = vector.load %arg8[%173, %c0_39, %c0_40] : memref<11x2x1xf32, #tpu.memory_space<vmem>>, vector<1x2x1xf32>
    %175 = vector.shape_cast %174 : vector<1x2x1xf32> to vector<2x1xf32>
    %176 = vector.shape_cast %172 : vector<2x1xf32> to vector<1x2x1xf32>
    tpu.vector_store %arg8[%173, %c0_39, %c0_40], %176 {strides = array<i32>} : memref<11x2x1xf32, #tpu.memory_space<vmem>>, vector<1x2x1xf32>,
    %c3_i32 = arith.constant 3 : i32
    %177 = arith.index_cast %c3_i32 : i32 to index
    %c0_41 = arith.constant 0 : index
    %c0_42 = arith.constant 0 : index
    %178 = vector.load %arg0[%177, %c0_41, %c0_42] : memref<8x2x1xf32, #tpu.memory_space<vmem>>, vector<1x2x1xf32>
    %179 = vector.shape_cast %178 : vector<1x2x1xf32> to vector<2x1xf32>
    %180 = vector.broadcast %179 : vector<2x1xf32> to vector<2x128xf32>
    %181 = vector.broadcast %0 : vector<1x128xf32> to vector<2x128xf32>
    %182 = arith.mulf %180, %181 : vector<2x128xf32>
    %cst_43 = arith.constant dense<0.000000e+00> : vector<2x128xf32>
    %183 = tpu.matmul %146, %1, %cst_43 {dimension_numbers = #tpu.dot_dimension_numbers<[1], [0], [0], [1], [0, 0, 1, 1], [], []>} : vector<2x32xf32>, vector<32x128xf32>, vector<2x128xf32> -> vector<2x128xf32>
    %184 = arith.addf %182, %183 : vector<2x128xf32>
    %185 = vector.broadcast %2 : vector<1x128xf32> to vector<2x128xf32>
    %186 = arith.addf %184, %185 : vector<2x128xf32>
    %187 = vector.extract_strided_slice %186 {offsets = [0, 0], sizes = [2, 96], strides = [1, 1]} : vector<2x128xf32> to vector<2x96xf32>
    %188 = arith.negf %187 : vector<2x96xf32>
    %189 = math.exp %188 : vector<2x96xf32>
    %cst_44 = arith.constant 1.000000e+00 : f32
    %190 = vector.broadcast %cst_44 : f32 to vector<2x96xf32>
    %191 = arith.addf %190, %189 : vector<2x96xf32>
    %192 = arith.divf %190, %191 : vector<2x96xf32>
    %193 = vector.extract_strided_slice %186 {offsets = [0, 96], sizes = [2, 32], strides = [1, 1]} : vector<2x128xf32> to vector<2x32xf32>
    %194 = math.tanh %193 : vector<2x32xf32>
    %195 = vector.extract_strided_slice %192 {offsets = [0, 0], sizes = [2, 32], strides = [1, 1]} : vector<2x96xf32> to vector<2x32xf32>
    %196 = vector.extract_strided_slice %192 {offsets = [0, 32], sizes = [2, 32], strides = [1, 1]} : vector<2x96xf32> to vector<2x32xf32>
    %197 = vector.extract_strided_slice %192 {offsets = [0, 64], sizes = [2, 32], strides = [1, 1]} : vector<2x96xf32> to vector<2x32xf32>
    %198 = arith.mulf %196, %144 : vector<2x32xf32>
    %199 = arith.mulf %195, %194 : vector<2x32xf32>
    %200 = arith.addf %198, %199 : vector<2x32xf32>
    %201 = math.tanh %200 : vector<2x32xf32>
    %202 = arith.mulf %197, %201 : vector<2x32xf32>
    %203 = tpu.concatenate %202, %166 in 1 : vector<2x32xf32>, vector<2x32xf32> -> vector<2x64xf32>
    %cst_45 = arith.constant dense<0.000000e+00> : vector<2x128xf32>
    %204 = tpu.matmul %203, %3, %cst_45 {dimension_numbers = #tpu.dot_dimension_numbers<[1], [0], [0], [1], [0, 0, 1, 1], [], []>} : vector<2x64xf32>, vector<64x128xf32>, vector<2x128xf32> -> vector<2x128xf32>
    %205 = vector.broadcast %4 : vector<1x128xf32> to vector<2x128xf32>
    %206 = arith.addf %204, %205 : vector<2x128xf32>
    %207 = vector.extract_strided_slice %206 {offsets = [0, 0], sizes = [2, 96], strides = [1, 1]} : vector<2x128xf32> to vector<2x96xf32>
    %208 = arith.negf %207 : vector<2x96xf32>
    %209 = math.exp %208 : vector<2x96xf32>
    %cst_46 = arith.constant 1.000000e+00 : f32
    %210 = vector.broadcast %cst_46 : f32 to vector<2x96xf32>
    %211 = arith.addf %210, %209 : vector<2x96xf32>
    %212 = arith.divf %210, %211 : vector<2x96xf32>
    %213 = vector.extract_strided_slice %206 {offsets = [0, 96], sizes = [2, 32], strides = [1, 1]} : vector<2x128xf32> to vector<2x32xf32>
    %214 = math.tanh %213 : vector<2x32xf32>
    %215 = vector.extract_strided_slice %212 {offsets = [0, 0], sizes = [2, 32], strides = [1, 1]} : vector<2x96xf32> to vector<2x32xf32>
    %216 = vector.extract_strided_slice %212 {offsets = [0, 32], sizes = [2, 32], strides = [1, 1]} : vector<2x96xf32> to vector<2x32xf32>
    %217 = vector.extract_strided_slice %212 {offsets = [0, 64], sizes = [2, 32], strides = [1, 1]} : vector<2x96xf32> to vector<2x32xf32>
    %218 = arith.mulf %216, %164 : vector<2x32xf32>
    %219 = arith.mulf %215, %214 : vector<2x32xf32>
    %220 = arith.addf %218, %219 : vector<2x32xf32>
    %221 = math.tanh %220 : vector<2x32xf32>
    %222 = arith.mulf %217, %221 : vector<2x32xf32>
    %223 = vector.broadcast %5 : vector<1x32xf32> to vector<2x32xf32>
    %224 = arith.mulf %222, %223 : vector<2x32xf32>
    %cst_47 = arith.constant dense<0.000000e+00> : vector<2xf32>
    %225 = vector.multi_reduction <add>, %224, %cst_47 [1] : vector<2x32xf32> to vector<2xf32>
    %226 = vector.shape_cast %225 : vector<2xf32> to vector<2x1xf32>
    %227 = vector.broadcast %6 : vector<1x1xf32> to vector<2x1xf32>
    %228 = arith.addf %226, %227 : vector<2x1xf32>
    %229 = arith.index_cast %c3_i32 : i32 to index
    %c0_48 = arith.constant 0 : index
    %c0_49 = arith.constant 0 : index
    %230 = vector.load %arg8[%229, %c0_48, %c0_49] : memref<11x2x1xf32, #tpu.memory_space<vmem>>, vector<1x2x1xf32>
    %231 = vector.shape_cast %230 : vector<1x2x1xf32> to vector<2x1xf32>
    %232 = vector.shape_cast %228 : vector<2x1xf32> to vector<1x2x1xf32>
    tpu.vector_store %arg8[%229, %c0_48, %c0_49], %232 {strides = array<i32>} : memref<11x2x1xf32, #tpu.memory_space<vmem>>, vector<1x2x1xf32>,
    %c4_i32 = arith.constant 4 : i32
    %233 = arith.index_cast %c4_i32 : i32 to index
    %c0_50 = arith.constant 0 : index
    %c0_51 = arith.constant 0 : index
    %234 = vector.load %arg0[%233, %c0_50, %c0_51] : memref<8x2x1xf32, #tpu.memory_space<vmem>>, vector<1x2x1xf32>
    %235 = vector.shape_cast %234 : vector<1x2x1xf32> to vector<2x1xf32>
    %236 = vector.broadcast %235 : vector<2x1xf32> to vector<2x128xf32>
    %237 = vector.broadcast %0 : vector<1x128xf32> to vector<2x128xf32>
    %238 = arith.mulf %236, %237 : vector<2x128xf32>
    %cst_52 = arith.constant dense<0.000000e+00> : vector<2x128xf32>
    %239 = tpu.matmul %202, %1, %cst_52 {dimension_numbers = #tpu.dot_dimension_numbers<[1], [0], [0], [1], [0, 0, 1, 1], [], []>} : vector<2x32xf32>, vector<32x128xf32>, vector<2x128xf32> -> vector<2x128xf32>
    %240 = arith.addf %238, %239 : vector<2x128xf32>
    %241 = vector.broadcast %2 : vector<1x128xf32> to vector<2x128xf32>
    %242 = arith.addf %240, %241 : vector<2x128xf32>
    %243 = vector.extract_strided_slice %242 {offsets = [0, 0], sizes = [2, 96], strides = [1, 1]} : vector<2x128xf32> to vector<2x96xf32>
    %244 = arith.negf %243 : vector<2x96xf32>
    %245 = math.exp %244 : vector<2x96xf32>
    %cst_53 = arith.constant 1.000000e+00 : f32
    %246 = vector.broadcast %cst_53 : f32 to vector<2x96xf32>
    %247 = arith.addf %246, %245 : vector<2x96xf32>
    %248 = arith.divf %246, %247 : vector<2x96xf32>
    %249 = vector.extract_strided_slice %242 {offsets = [0, 96], sizes = [2, 32], strides = [1, 1]} : vector<2x128xf32> to vector<2x32xf32>
    %250 = math.tanh %249 : vector<2x32xf32>
    %251 = vector.extract_strided_slice %248 {offsets = [0, 0], sizes = [2, 32], strides = [1, 1]} : vector<2x96xf32> to vector<2x32xf32>
    %252 = vector.extract_strided_slice %248 {offsets = [0, 32], sizes = [2, 32], strides = [1, 1]} : vector<2x96xf32> to vector<2x32xf32>
    %253 = vector.extract_strided_slice %248 {offsets = [0, 64], sizes = [2, 32], strides = [1, 1]} : vector<2x96xf32> to vector<2x32xf32>
    %254 = arith.mulf %252, %200 : vector<2x32xf32>
    %255 = arith.mulf %251, %250 : vector<2x32xf32>
    %256 = arith.addf %254, %255 : vector<2x32xf32>
    %257 = math.tanh %256 : vector<2x32xf32>
    %258 = arith.mulf %253, %257 : vector<2x32xf32>
    %259 = tpu.concatenate %258, %222 in 1 : vector<2x32xf32>, vector<2x32xf32> -> vector<2x64xf32>
    %cst_54 = arith.constant dense<0.000000e+00> : vector<2x128xf32>
    %260 = tpu.matmul %259, %3, %cst_54 {dimension_numbers = #tpu.dot_dimension_numbers<[1], [0], [0], [1], [0, 0, 1, 1], [], []>} : vector<2x64xf32>, vector<64x128xf32>, vector<2x128xf32> -> vector<2x128xf32>
    %261 = vector.broadcast %4 : vector<1x128xf32> to vector<2x128xf32>
    %262 = arith.addf %260, %261 : vector<2x128xf32>
    %263 = vector.extract_strided_slice %262 {offsets = [0, 0], sizes = [2, 96], strides = [1, 1]} : vector<2x128xf32> to vector<2x96xf32>
    %264 = arith.negf %263 : vector<2x96xf32>
    %265 = math.exp %264 : vector<2x96xf32>
    %cst_55 = arith.constant 1.000000e+00 : f32
    %266 = vector.broadcast %cst_55 : f32 to vector<2x96xf32>
    %267 = arith.addf %266, %265 : vector<2x96xf32>
    %268 = arith.divf %266, %267 : vector<2x96xf32>
    %269 = vector.extract_strided_slice %262 {offsets = [0, 96], sizes = [2, 32], strides = [1, 1]} : vector<2x128xf32> to vector<2x32xf32>
    %270 = math.tanh %269 : vector<2x32xf32>
    %271 = vector.extract_strided_slice %268 {offsets = [0, 0], sizes = [2, 32], strides = [1, 1]} : vector<2x96xf32> to vector<2x32xf32>
    %272 = vector.extract_strided_slice %268 {offsets = [0, 32], sizes = [2, 32], strides = [1, 1]} : vector<2x96xf32> to vector<2x32xf32>
    %273 = vector.extract_strided_slice %268 {offsets = [0, 64], sizes = [2, 32], strides = [1, 1]} : vector<2x96xf32> to vector<2x32xf32>
    %274 = arith.mulf %272, %220 : vector<2x32xf32>
    %275 = arith.mulf %271, %270 : vector<2x32xf32>
    %276 = arith.addf %274, %275 : vector<2x32xf32>
    %277 = math.tanh %276 : vector<2x32xf32>
    %278 = arith.mulf %273, %277 : vector<2x32xf32>
    %279 = vector.broadcast %5 : vector<1x32xf32> to vector<2x32xf32>
    %280 = arith.mulf %278, %279 : vector<2x32xf32>
    %cst_56 = arith.constant dense<0.000000e+00> : vector<2xf32>
    %281 = vector.multi_reduction <add>, %280, %cst_56 [1] : vector<2x32xf32> to vector<2xf32>
    %282 = vector.shape_cast %281 : vector<2xf32> to vector<2x1xf32>
    %283 = vector.broadcast %6 : vector<1x1xf32> to vector<2x1xf32>
    %284 = arith.addf %282, %283 : vector<2x1xf32>
    %285 = arith.index_cast %c4_i32 : i32 to index
    %c0_57 = arith.constant 0 : index
    %c0_58 = arith.constant 0 : index
    %286 = vector.load %arg8[%285, %c0_57, %c0_58] : memref<11x2x1xf32, #tpu.memory_space<vmem>>, vector<1x2x1xf32>
    %287 = vector.shape_cast %286 : vector<1x2x1xf32> to vector<2x1xf32>
    %288 = vector.shape_cast %284 : vector<2x1xf32> to vector<1x2x1xf32>
    tpu.vector_store %arg8[%285, %c0_57, %c0_58], %288 {strides = array<i32>} : memref<11x2x1xf32, #tpu.memory_space<vmem>>, vector<1x2x1xf32>,
    %c5_i32 = arith.constant 5 : i32
    %289 = arith.index_cast %c5_i32 : i32 to index
    %c0_59 = arith.constant 0 : index
    %c0_60 = arith.constant 0 : index
    %290 = vector.load %arg0[%289, %c0_59, %c0_60] : memref<8x2x1xf32, #tpu.memory_space<vmem>>, vector<1x2x1xf32>
    %291 = vector.shape_cast %290 : vector<1x2x1xf32> to vector<2x1xf32>
    %292 = vector.broadcast %291 : vector<2x1xf32> to vector<2x128xf32>
    %293 = vector.broadcast %0 : vector<1x128xf32> to vector<2x128xf32>
    %294 = arith.mulf %292, %293 : vector<2x128xf32>
    %cst_61 = arith.constant dense<0.000000e+00> : vector<2x128xf32>
    %295 = tpu.matmul %258, %1, %cst_61 {dimension_numbers = #tpu.dot_dimension_numbers<[1], [0], [0], [1], [0, 0, 1, 1], [], []>} : vector<2x32xf32>, vector<32x128xf32>, vector<2x128xf32> -> vector<2x128xf32>
    %296 = arith.addf %294, %295 : vector<2x128xf32>
    %297 = vector.broadcast %2 : vector<1x128xf32> to vector<2x128xf32>
    %298 = arith.addf %296, %297 : vector<2x128xf32>
    %299 = vector.extract_strided_slice %298 {offsets = [0, 0], sizes = [2, 96], strides = [1, 1]} : vector<2x128xf32> to vector<2x96xf32>
    %300 = arith.negf %299 : vector<2x96xf32>
    %301 = math.exp %300 : vector<2x96xf32>
    %cst_62 = arith.constant 1.000000e+00 : f32
    %302 = vector.broadcast %cst_62 : f32 to vector<2x96xf32>
    %303 = arith.addf %302, %301 : vector<2x96xf32>
    %304 = arith.divf %302, %303 : vector<2x96xf32>
    %305 = vector.extract_strided_slice %298 {offsets = [0, 96], sizes = [2, 32], strides = [1, 1]} : vector<2x128xf32> to vector<2x32xf32>
    %306 = math.tanh %305 : vector<2x32xf32>
    %307 = vector.extract_strided_slice %304 {offsets = [0, 0], sizes = [2, 32], strides = [1, 1]} : vector<2x96xf32> to vector<2x32xf32>
    %308 = vector.extract_strided_slice %304 {offsets = [0, 32], sizes = [2, 32], strides = [1, 1]} : vector<2x96xf32> to vector<2x32xf32>
    %309 = vector.extract_strided_slice %304 {offsets = [0, 64], sizes = [2, 32], strides = [1, 1]} : vector<2x96xf32> to vector<2x32xf32>
    %310 = arith.mulf %308, %256 : vector<2x32xf32>
    %311 = arith.mulf %307, %306 : vector<2x32xf32>
    %312 = arith.addf %310, %311 : vector<2x32xf32>
    %313 = math.tanh %312 : vector<2x32xf32>
    %314 = arith.mulf %309, %313 : vector<2x32xf32>
    %315 = tpu.concatenate %314, %278 in 1 : vector<2x32xf32>, vector<2x32xf32> -> vector<2x64xf32>
    %cst_63 = arith.constant dense<0.000000e+00> : vector<2x128xf32>
    %316 = tpu.matmul %315, %3, %cst_63 {dimension_numbers = #tpu.dot_dimension_numbers<[1], [0], [0], [1], [0, 0, 1, 1], [], []>} : vector<2x64xf32>, vector<64x128xf32>, vector<2x128xf32> -> vector<2x128xf32>
    %317 = vector.broadcast %4 : vector<1x128xf32> to vector<2x128xf32>
    %318 = arith.addf %316, %317 : vector<2x128xf32>
    %319 = vector.extract_strided_slice %318 {offsets = [0, 0], sizes = [2, 96], strides = [1, 1]} : vector<2x128xf32> to vector<2x96xf32>
    %320 = arith.negf %319 : vector<2x96xf32>
    %321 = math.exp %320 : vector<2x96xf32>
    %cst_64 = arith.constant 1.000000e+00 : f32
    %322 = vector.broadcast %cst_64 : f32 to vector<2x96xf32>
    %323 = arith.addf %322, %321 : vector<2x96xf32>
    %324 = arith.divf %322, %323 : vector<2x96xf32>
    %325 = vector.extract_strided_slice %318 {offsets = [0, 96], sizes = [2, 32], strides = [1, 1]} : vector<2x128xf32> to vector<2x32xf32>
    %326 = math.tanh %325 : vector<2x32xf32>
    %327 = vector.extract_strided_slice %324 {offsets = [0, 0], sizes = [2, 32], strides = [1, 1]} : vector<2x96xf32> to vector<2x32xf32>
    %328 = vector.extract_strided_slice %324 {offsets = [0, 32], sizes = [2, 32], strides = [1, 1]} : vector<2x96xf32> to vector<2x32xf32>
    %329 = vector.extract_strided_slice %324 {offsets = [0, 64], sizes = [2, 32], strides = [1, 1]} : vector<2x96xf32> to vector<2x32xf32>
    %330 = arith.mulf %328, %276 : vector<2x32xf32>
    %331 = arith.mulf %327, %326 : vector<2x32xf32>
    %332 = arith.addf %330, %331 : vector<2x32xf32>
    %333 = math.tanh %332 : vector<2x32xf32>
    %334 = arith.mulf %329, %333 : vector<2x32xf32>
    %335 = vector.broadcast %5 : vector<1x32xf32> to vector<2x32xf32>
    %336 = arith.mulf %334, %335 : vector<2x32xf32>
    %cst_65 = arith.constant dense<0.000000e+00> : vector<2xf32>
    %337 = vector.multi_reduction <add>, %336, %cst_65 [1] : vector<2x32xf32> to vector<2xf32>
    %338 = vector.shape_cast %337 : vector<2xf32> to vector<2x1xf32>
    %339 = vector.broadcast %6 : vector<1x1xf32> to vector<2x1xf32>
    %340 = arith.addf %338, %339 : vector<2x1xf32>
    %341 = arith.index_cast %c5_i32 : i32 to index
    %c0_66 = arith.constant 0 : index
    %c0_67 = arith.constant 0 : index
    %342 = vector.load %arg8[%341, %c0_66, %c0_67] : memref<11x2x1xf32, #tpu.memory_space<vmem>>, vector<1x2x1xf32>
    %343 = vector.shape_cast %342 : vector<1x2x1xf32> to vector<2x1xf32>
    %344 = vector.shape_cast %340 : vector<2x1xf32> to vector<1x2x1xf32>
    tpu.vector_store %arg8[%341, %c0_66, %c0_67], %344 {strides = array<i32>} : memref<11x2x1xf32, #tpu.memory_space<vmem>>, vector<1x2x1xf32>,
    %c6_i32 = arith.constant 6 : i32
    %345 = arith.index_cast %c6_i32 : i32 to index
    %c0_68 = arith.constant 0 : index
    %c0_69 = arith.constant 0 : index
    %346 = vector.load %arg0[%345, %c0_68, %c0_69] : memref<8x2x1xf32, #tpu.memory_space<vmem>>, vector<1x2x1xf32>
    %347 = vector.shape_cast %346 : vector<1x2x1xf32> to vector<2x1xf32>
    %348 = vector.broadcast %347 : vector<2x1xf32> to vector<2x128xf32>
    %349 = vector.broadcast %0 : vector<1x128xf32> to vector<2x128xf32>
    %350 = arith.mulf %348, %349 : vector<2x128xf32>
    %cst_70 = arith.constant dense<0.000000e+00> : vector<2x128xf32>
    %351 = tpu.matmul %314, %1, %cst_70 {dimension_numbers = #tpu.dot_dimension_numbers<[1], [0], [0], [1], [0, 0, 1, 1], [], []>} : vector<2x32xf32>, vector<32x128xf32>, vector<2x128xf32> -> vector<2x128xf32>
    %352 = arith.addf %350, %351 : vector<2x128xf32>
    %353 = vector.broadcast %2 : vector<1x128xf32> to vector<2x128xf32>
    %354 = arith.addf %352, %353 : vector<2x128xf32>
    %355 = vector.extract_strided_slice %354 {offsets = [0, 0], sizes = [2, 96], strides = [1, 1]} : vector<2x128xf32> to vector<2x96xf32>
    %356 = arith.negf %355 : vector<2x96xf32>
    %357 = math.exp %356 : vector<2x96xf32>
    %cst_71 = arith.constant 1.000000e+00 : f32
    %358 = vector.broadcast %cst_71 : f32 to vector<2x96xf32>
    %359 = arith.addf %358, %357 : vector<2x96xf32>
    %360 = arith.divf %358, %359 : vector<2x96xf32>
    %361 = vector.extract_strided_slice %354 {offsets = [0, 96], sizes = [2, 32], strides = [1, 1]} : vector<2x128xf32> to vector<2x32xf32>
    %362 = math.tanh %361 : vector<2x32xf32>
    %363 = vector.extract_strided_slice %360 {offsets = [0, 0], sizes = [2, 32], strides = [1, 1]} : vector<2x96xf32> to vector<2x32xf32>
    %364 = vector.extract_strided_slice %360 {offsets = [0, 32], sizes = [2, 32], strides = [1, 1]} : vector<2x96xf32> to vector<2x32xf32>
    %365 = vector.extract_strided_slice %360 {offsets = [0, 64], sizes = [2, 32], strides = [1, 1]} : vector<2x96xf32> to vector<2x32xf32>
    %366 = arith.mulf %364, %312 : vector<2x32xf32>
    %367 = arith.mulf %363, %362 : vector<2x32xf32>
    %368 = arith.addf %366, %367 : vector<2x32xf32>
    %369 = math.tanh %368 : vector<2x32xf32>
    %370 = arith.mulf %365, %369 : vector<2x32xf32>
    %371 = tpu.concatenate %370, %334 in 1 : vector<2x32xf32>, vector<2x32xf32> -> vector<2x64xf32>
    %cst_72 = arith.constant dense<0.000000e+00> : vector<2x128xf32>
    %372 = tpu.matmul %371, %3, %cst_72 {dimension_numbers = #tpu.dot_dimension_numbers<[1], [0], [0], [1], [0, 0, 1, 1], [], []>} : vector<2x64xf32>, vector<64x128xf32>, vector<2x128xf32> -> vector<2x128xf32>
    %373 = vector.broadcast %4 : vector<1x128xf32> to vector<2x128xf32>
    %374 = arith.addf %372, %373 : vector<2x128xf32>
    %375 = vector.extract_strided_slice %374 {offsets = [0, 0], sizes = [2, 96], strides = [1, 1]} : vector<2x128xf32> to vector<2x96xf32>
    %376 = arith.negf %375 : vector<2x96xf32>
    %377 = math.exp %376 : vector<2x96xf32>
    %cst_73 = arith.constant 1.000000e+00 : f32
    %378 = vector.broadcast %cst_73 : f32 to vector<2x96xf32>
    %379 = arith.addf %378, %377 : vector<2x96xf32>
    %380 = arith.divf %378, %379 : vector<2x96xf32>
    %381 = vector.extract_strided_slice %374 {offsets = [0, 96], sizes = [2, 32], strides = [1, 1]} : vector<2x128xf32> to vector<2x32xf32>
    %382 = math.tanh %381 : vector<2x32xf32>
    %383 = vector.extract_strided_slice %380 {offsets = [0, 0], sizes = [2, 32], strides = [1, 1]} : vector<2x96xf32> to vector<2x32xf32>
    %384 = vector.extract_strided_slice %380 {offsets = [0, 32], sizes = [2, 32], strides = [1, 1]} : vector<2x96xf32> to vector<2x32xf32>
    %385 = vector.extract_strided_slice %380 {offsets = [0, 64], sizes = [2, 32], strides = [1, 1]} : vector<2x96xf32> to vector<2x32xf32>
    %386 = arith.mulf %384, %332 : vector<2x32xf32>
    %387 = arith.mulf %383, %382 : vector<2x32xf32>
    %388 = arith.addf %386, %387 : vector<2x32xf32>
    %389 = math.tanh %388 : vector<2x32xf32>
    %390 = arith.mulf %385, %389 : vector<2x32xf32>
    %391 = vector.broadcast %5 : vector<1x32xf32> to vector<2x32xf32>
    %392 = arith.mulf %390, %391 : vector<2x32xf32>
    %cst_74 = arith.constant dense<0.000000e+00> : vector<2xf32>
    %393 = vector.multi_reduction <add>, %392, %cst_74 [1] : vector<2x32xf32> to vector<2xf32>
    %394 = vector.shape_cast %393 : vector<2xf32> to vector<2x1xf32>
    %395 = vector.broadcast %6 : vector<1x1xf32> to vector<2x1xf32>
    %396 = arith.addf %394, %395 : vector<2x1xf32>
    %397 = arith.index_cast %c6_i32 : i32 to index
    %c0_75 = arith.constant 0 : index
    %c0_76 = arith.constant 0 : index
    %398 = vector.load %arg8[%397, %c0_75, %c0_76] : memref<11x2x1xf32, #tpu.memory_space<vmem>>, vector<1x2x1xf32>
    %399 = vector.shape_cast %398 : vector<1x2x1xf32> to vector<2x1xf32>
    %400 = vector.shape_cast %396 : vector<2x1xf32> to vector<1x2x1xf32>
    tpu.vector_store %arg8[%397, %c0_75, %c0_76], %400 {strides = array<i32>} : memref<11x2x1xf32, #tpu.memory_space<vmem>>, vector<1x2x1xf32>,
    %c7_i32 = arith.constant 7 : i32
    %401 = arith.index_cast %c7_i32 : i32 to index
    %c0_77 = arith.constant 0 : index
    %c0_78 = arith.constant 0 : index
    %402 = vector.load %arg0[%401, %c0_77, %c0_78] : memref<8x2x1xf32, #tpu.memory_space<vmem>>, vector<1x2x1xf32>
    %403 = vector.shape_cast %402 : vector<1x2x1xf32> to vector<2x1xf32>
    %404 = vector.broadcast %403 : vector<2x1xf32> to vector<2x128xf32>
    %405 = vector.broadcast %0 : vector<1x128xf32> to vector<2x128xf32>
    %406 = arith.mulf %404, %405 : vector<2x128xf32>
    %cst_79 = arith.constant dense<0.000000e+00> : vector<2x128xf32>
    %407 = tpu.matmul %370, %1, %cst_79 {dimension_numbers = #tpu.dot_dimension_numbers<[1], [0], [0], [1], [0, 0, 1, 1], [], []>} : vector<2x32xf32>, vector<32x128xf32>, vector<2x128xf32> -> vector<2x128xf32>
    %408 = arith.addf %406, %407 : vector<2x128xf32>
    %409 = vector.broadcast %2 : vector<1x128xf32> to vector<2x128xf32>
    %410 = arith.addf %408, %409 : vector<2x128xf32>
    %411 = vector.extract_strided_slice %410 {offsets = [0, 0], sizes = [2, 96], strides = [1, 1]} : vector<2x128xf32> to vector<2x96xf32>
    %412 = arith.negf %411 : vector<2x96xf32>
    %413 = math.exp %412 : vector<2x96xf32>
    %cst_80 = arith.constant 1.000000e+00 : f32
    %414 = vector.broadcast %cst_80 : f32 to vector<2x96xf32>
    %415 = arith.addf %414, %413 : vector<2x96xf32>
    %416 = arith.divf %414, %415 : vector<2x96xf32>
    %417 = vector.extract_strided_slice %410 {offsets = [0, 96], sizes = [2, 32], strides = [1, 1]} : vector<2x128xf32> to vector<2x32xf32>
    %418 = math.tanh %417 : vector<2x32xf32>
    %419 = vector.extract_strided_slice %416 {offsets = [0, 0], sizes = [2, 32], strides = [1, 1]} : vector<2x96xf32> to vector<2x32xf32>
    %420 = vector.extract_strided_slice %416 {offsets = [0, 32], sizes = [2, 32], strides = [1, 1]} : vector<2x96xf32> to vector<2x32xf32>
    %421 = vector.extract_strided_slice %416 {offsets = [0, 64], sizes = [2, 32], strides = [1, 1]} : vector<2x96xf32> to vector<2x32xf32>
    %422 = arith.mulf %420, %368 : vector<2x32xf32>
    %423 = arith.mulf %419, %418 : vector<2x32xf32>
    %424 = arith.addf %422, %423 : vector<2x32xf32>
    %425 = math.tanh %424 : vector<2x32xf32>
    %426 = arith.mulf %421, %425 : vector<2x32xf32>
    %427 = tpu.concatenate %426, %390 in 1 : vector<2x32xf32>, vector<2x32xf32> -> vector<2x64xf32>
    %cst_81 = arith.constant dense<0.000000e+00> : vector<2x128xf32>
    %428 = tpu.matmul %427, %3, %cst_81 {dimension_numbers = #tpu.dot_dimension_numbers<[1], [0], [0], [1], [0, 0, 1, 1], [], []>} : vector<2x64xf32>, vector<64x128xf32>, vector<2x128xf32> -> vector<2x128xf32>
    %429 = vector.broadcast %4 : vector<1x128xf32> to vector<2x128xf32>
    %430 = arith.addf %428, %429 : vector<2x128xf32>
    %431 = vector.extract_strided_slice %430 {offsets = [0, 0], sizes = [2, 96], strides = [1, 1]} : vector<2x128xf32> to vector<2x96xf32>
    %432 = arith.negf %431 : vector<2x96xf32>
    %433 = math.exp %432 : vector<2x96xf32>
    %cst_82 = arith.constant 1.000000e+00 : f32
    %434 = vector.broadcast %cst_82 : f32 to vector<2x96xf32>
    %435 = arith.addf %434, %433 : vector<2x96xf32>
    %436 = arith.divf %434, %435 : vector<2x96xf32>
    %437 = vector.extract_strided_slice %430 {offsets = [0, 96], sizes = [2, 32], strides = [1, 1]} : vector<2x128xf32> to vector<2x32xf32>
    %438 = math.tanh %437 : vector<2x32xf32>
    %439 = vector.extract_strided_slice %436 {offsets = [0, 0], sizes = [2, 32], strides = [1, 1]} : vector<2x96xf32> to vector<2x32xf32>
    %440 = vector.extract_strided_slice %436 {offsets = [0, 32], sizes = [2, 32], strides = [1, 1]} : vector<2x96xf32> to vector<2x32xf32>
    %441 = vector.extract_strided_slice %436 {offsets = [0, 64], sizes = [2, 32], strides = [1, 1]} : vector<2x96xf32> to vector<2x32xf32>
    %442 = arith.mulf %440, %388 : vector<2x32xf32>
    %443 = arith.mulf %439, %438 : vector<2x32xf32>
    %444 = arith.addf %442, %443 : vector<2x32xf32>
    %445 = math.tanh %444 : vector<2x32xf32>
    %446 = arith.mulf %441, %445 : vector<2x32xf32>
    %447 = vector.broadcast %5 : vector<1x32xf32> to vector<2x32xf32>
    %448 = arith.mulf %446, %447 : vector<2x32xf32>
    %cst_83 = arith.constant dense<0.000000e+00> : vector<2xf32>
    %449 = vector.multi_reduction <add>, %448, %cst_83 [1] : vector<2x32xf32> to vector<2xf32>
    %450 = vector.shape_cast %449 : vector<2xf32> to vector<2x1xf32>
    %451 = vector.broadcast %6 : vector<1x1xf32> to vector<2x1xf32>
    %452 = arith.addf %450, %451 : vector<2x1xf32>
    %453 = arith.index_cast %c7_i32 : i32 to index
    %c0_84 = arith.constant 0 : index
    %c0_85 = arith.constant 0 : index
    %454 = vector.load %arg8[%453, %c0_84, %c0_85] : memref<11x2x1xf32, #tpu.memory_space<vmem>>, vector<1x2x1xf32>
    %455 = vector.shape_cast %454 : vector<1x2x1xf32> to vector<2x1xf32>
    %456 = vector.shape_cast %452 : vector<2x1xf32> to vector<1x2x1xf32>
    tpu.vector_store %arg8[%453, %c0_84, %c0_85], %456 {strides = array<i32>} : memref<11x2x1xf32, #tpu.memory_space<vmem>>, vector<1x2x1xf32>,
    %c8_i32 = arith.constant 8 : i32
    %c0_i32_86 = arith.constant 0 : i32
    %457 = vector.broadcast %452 : vector<2x1xf32> to vector<2x128xf32>
    %458 = vector.broadcast %0 : vector<1x128xf32> to vector<2x128xf32>
    %459 = arith.mulf %457, %458 : vector<2x128xf32>
    %cst_87 = arith.constant dense<0.000000e+00> : vector<2x128xf32>
    %460 = tpu.matmul %426, %1, %cst_87 {dimension_numbers = #tpu.dot_dimension_numbers<[1], [0], [0], [1], [0, 0, 1, 1], [], []>} : vector<2x32xf32>, vector<32x128xf32>, vector<2x128xf32> -> vector<2x128xf32>
    %461 = arith.addf %459, %460 : vector<2x128xf32>
    %462 = vector.broadcast %2 : vector<1x128xf32> to vector<2x128xf32>
    %463 = arith.addf %461, %462 : vector<2x128xf32>
    %464 = vector.extract_strided_slice %463 {offsets = [0, 0], sizes = [2, 96], strides = [1, 1]} : vector<2x128xf32> to vector<2x96xf32>
    %465 = arith.negf %464 : vector<2x96xf32>
    %466 = math.exp %465 : vector<2x96xf32>
    %cst_88 = arith.constant 1.000000e+00 : f32
    %467 = vector.broadcast %cst_88 : f32 to vector<2x96xf32>
    %468 = arith.addf %467, %466 : vector<2x96xf32>
    %469 = arith.divf %467, %468 : vector<2x96xf32>
    %470 = vector.extract_strided_slice %463 {offsets = [0, 96], sizes = [2, 32], strides = [1, 1]} : vector<2x128xf32> to vector<2x32xf32>
    %471 = math.tanh %470 : vector<2x32xf32>
    %472 = vector.extract_strided_slice %469 {offsets = [0, 0], sizes = [2, 32], strides = [1, 1]} : vector<2x96xf32> to vector<2x32xf32>
    %473 = vector.extract_strided_slice %469 {offsets = [0, 32], sizes = [2, 32], strides = [1, 1]} : vector<2x96xf32> to vector<2x32xf32>
    %474 = vector.extract_strided_slice %469 {offsets = [0, 64], sizes = [2, 32], strides = [1, 1]} : vector<2x96xf32> to vector<2x32xf32>
    %475 = arith.mulf %473, %424 : vector<2x32xf32>
    %476 = arith.mulf %472, %471 : vector<2x32xf32>
    %477 = arith.addf %475, %476 : vector<2x32xf32>
    %478 = math.tanh %477 : vector<2x32xf32>
    %479 = arith.mulf %474, %478 : vector<2x32xf32>
    %480 = tpu.concatenate %479, %446 in 1 : vector<2x32xf32>, vector<2x32xf32> -> vector<2x64xf32>
    %cst_89 = arith.constant dense<0.000000e+00> : vector<2x128xf32>
    %481 = tpu.matmul %480, %3, %cst_89 {dimension_numbers = #tpu.dot_dimension_numbers<[1], [0], [0], [1], [0, 0, 1, 1], [], []>} : vector<2x64xf32>, vector<64x128xf32>, vector<2x128xf32> -> vector<2x128xf32>
    %482 = vector.broadcast %4 : vector<1x128xf32> to vector<2x128xf32>
    %483 = arith.addf %481, %482 : vector<2x128xf32>
    %484 = vector.extract_strided_slice %483 {offsets = [0, 0], sizes = [2, 96], strides = [1, 1]} : vector<2x128xf32> to vector<2x96xf32>
    %485 = arith.negf %484 : vector<2x96xf32>
    %486 = math.exp %485 : vector<2x96xf32>
    %cst_90 = arith.constant 1.000000e+00 : f32
    %487 = vector.broadcast %cst_90 : f32 to vector<2x96xf32>
    %488 = arith.addf %487, %486 : vector<2x96xf32>
    %489 = arith.divf %487, %488 : vector<2x96xf32>
    %490 = vector.extract_strided_slice %483 {offsets = [0, 96], sizes = [2, 32], strides = [1, 1]} : vector<2x128xf32> to vector<2x32xf32>
    %491 = math.tanh %490 : vector<2x32xf32>
    %492 = vector.extract_strided_slice %489 {offsets = [0, 0], sizes = [2, 32], strides = [1, 1]} : vector<2x96xf32> to vector<2x32xf32>
    %493 = vector.extract_strided_slice %489 {offsets = [0, 32], sizes = [2, 32], strides = [1, 1]} : vector<2x96xf32> to vector<2x32xf32>
    %494 = vector.extract_strided_slice %489 {offsets = [0, 64], sizes = [2, 32], strides = [1, 1]} : vector<2x96xf32> to vector<2x32xf32>
    %495 = arith.mulf %493, %444 : vector<2x32xf32>
    %496 = arith.mulf %492, %491 : vector<2x32xf32>
    %497 = arith.addf %495, %496 : vector<2x32xf32>
    %498 = math.tanh %497 : vector<2x32xf32>
    %499 = arith.mulf %494, %498 : vector<2x32xf32>
    %500 = vector.broadcast %5 : vector<1x32xf32> to vector<2x32xf32>
    %501 = arith.mulf %499, %500 : vector<2x32xf32>
    %cst_91 = arith.constant dense<0.000000e+00> : vector<2xf32>
    %502 = vector.multi_reduction <add>, %501, %cst_91 [1] : vector<2x32xf32> to vector<2xf32>
    %503 = vector.shape_cast %502 : vector<2xf32> to vector<2x1xf32>
    %504 = vector.broadcast %6 : vector<1x1xf32> to vector<2x1xf32>
    %505 = arith.addf %503, %504 : vector<2x1xf32>
    %c8_i32_92 = arith.constant 8 : i32
    %506 = arith.addi %c8_i32_92, %c0_i32_86 : i32
    %507 = arith.index_cast %506 : i32 to index
    %c0_93 = arith.constant 0 : index
    %c0_94 = arith.constant 0 : index
    %508 = vector.load %arg8[%507, %c0_93, %c0_94] : memref<11x2x1xf32, #tpu.memory_space<vmem>>, vector<1x2x1xf32>
    %509 = vector.shape_cast %508 : vector<1x2x1xf32> to vector<2x1xf32>
    %510 = vector.shape_cast %505 : vector<2x1xf32> to vector<1x2x1xf32>
    tpu.vector_store %arg8[%507, %c0_93, %c0_94], %510 {strides = array<i32>} : memref<11x2x1xf32, #tpu.memory_space<vmem>>, vector<1x2x1xf32>,
    %c1_i32_95 = arith.constant 1 : i32
    %511 = vector.broadcast %505 : vector<2x1xf32> to vector<2x128xf32>
    %512 = vector.broadcast %0 : vector<1x128xf32> to vector<2x128xf32>
    %513 = arith.mulf %511, %512 : vector<2x128xf32>
    %cst_96 = arith.constant dense<0.000000e+00> : vector<2x128xf32>
    %514 = tpu.matmul %479, %1, %cst_96 {dimension_numbers = #tpu.dot_dimension_numbers<[1], [0], [0], [1], [0, 0, 1, 1], [], []>} : vector<2x32xf32>, vector<32x128xf32>, vector<2x128xf32> -> vector<2x128xf32>
    %515 = arith.addf %513, %514 : vector<2x128xf32>
    %516 = vector.broadcast %2 : vector<1x128xf32> to vector<2x128xf32>
    %517 = arith.addf %515, %516 : vector<2x128xf32>
    %518 = vector.extract_strided_slice %517 {offsets = [0, 0], sizes = [2, 96], strides = [1, 1]} : vector<2x128xf32> to vector<2x96xf32>
    %519 = arith.negf %518 : vector<2x96xf32>
    %520 = math.exp %519 : vector<2x96xf32>
    %cst_97 = arith.constant 1.000000e+00 : f32
    %521 = vector.broadcast %cst_97 : f32 to vector<2x96xf32>
    %522 = arith.addf %521, %520 : vector<2x96xf32>
    %523 = arith.divf %521, %522 : vector<2x96xf32>
    %524 = vector.extract_strided_slice %517 {offsets = [0, 96], sizes = [2, 32], strides = [1, 1]} : vector<2x128xf32> to vector<2x32xf32>
    %525 = math.tanh %524 : vector<2x32xf32>
    %526 = vector.extract_strided_slice %523 {offsets = [0, 0], sizes = [2, 32], strides = [1, 1]} : vector<2x96xf32> to vector<2x32xf32>
    %527 = vector.extract_strided_slice %523 {offsets = [0, 32], sizes = [2, 32], strides = [1, 1]} : vector<2x96xf32> to vector<2x32xf32>
    %528 = vector.extract_strided_slice %523 {offsets = [0, 64], sizes = [2, 32], strides = [1, 1]} : vector<2x96xf32> to vector<2x32xf32>
    %529 = arith.mulf %527, %477 : vector<2x32xf32>
    %530 = arith.mulf %526, %525 : vector<2x32xf32>
    %531 = arith.addf %529, %530 : vector<2x32xf32>
    %532 = math.tanh %531 : vector<2x32xf32>
    %533 = arith.mulf %528, %532 : vector<2x32xf32>
    %534 = tpu.concatenate %533, %499 in 1 : vector<2x32xf32>, vector<2x32xf32> -> vector<2x64xf32>
    %cst_98 = arith.constant dense<0.000000e+00> : vector<2x128xf32>
    %535 = tpu.matmul %534, %3, %cst_98 {dimension_numbers = #tpu.dot_dimension_numbers<[1], [0], [0], [1], [0, 0, 1, 1], [], []>} : vector<2x64xf32>, vector<64x128xf32>, vector<2x128xf32> -> vector<2x128xf32>
    %536 = vector.broadcast %4 : vector<1x128xf32> to vector<2x128xf32>
    %537 = arith.addf %535, %536 : vector<2x128xf32>
    %538 = vector.extract_strided_slice %537 {offsets = [0, 0], sizes = [2, 96], strides = [1, 1]} : vector<2x128xf32> to vector<2x96xf32>
    %539 = arith.negf %538 : vector<2x96xf32>
    %540 = math.exp %539 : vector<2x96xf32>
    %cst_99 = arith.constant 1.000000e+00 : f32
    %541 = vector.broadcast %cst_99 : f32 to vector<2x96xf32>
    %542 = arith.addf %541, %540 : vector<2x96xf32>
    %543 = arith.divf %541, %542 : vector<2x96xf32>
    %544 = vector.extract_strided_slice %537 {offsets = [0, 96], sizes = [2, 32], strides = [1, 1]} : vector<2x128xf32> to vector<2x32xf32>
    %545 = math.tanh %544 : vector<2x32xf32>
    %546 = vector.extract_strided_slice %543 {offsets = [0, 0], sizes = [2, 32], strides = [1, 1]} : vector<2x96xf32> to vector<2x32xf32>
    %547 = vector.extract_strided_slice %543 {offsets = [0, 32], sizes = [2, 32], strides = [1, 1]} : vector<2x96xf32> to vector<2x32xf32>
    %548 = vector.extract_strided_slice %543 {offsets = [0, 64], sizes = [2, 32], strides = [1, 1]} : vector<2x96xf32> to vector<2x32xf32>
    %549 = arith.mulf %547, %497 : vector<2x32xf32>
    %550 = arith.mulf %546, %545 : vector<2x32xf32>
    %551 = arith.addf %549, %550 : vector<2x32xf32>
    %552 = math.tanh %551 : vector<2x32xf32>
    %553 = arith.mulf %548, %552 : vector<2x32xf32>
    %554 = vector.broadcast %5 : vector<1x32xf32> to vector<2x32xf32>
    %555 = arith.mulf %553, %554 : vector<2x32xf32>
    %cst_100 = arith.constant dense<0.000000e+00> : vector<2xf32>
    %556 = vector.multi_reduction <add>, %555, %cst_100 [1] : vector<2x32xf32> to vector<2xf32>
    %557 = vector.shape_cast %556 : vector<2xf32> to vector<2x1xf32>
    %558 = vector.broadcast %6 : vector<1x1xf32> to vector<2x1xf32>
    %559 = arith.addf %557, %558 : vector<2x1xf32>
    %c8_i32_101 = arith.constant 8 : i32
    %560 = arith.addi %c8_i32_101, %c1_i32_95 : i32
    %561 = arith.index_cast %560 : i32 to index
    %c0_102 = arith.constant 0 : index
    %c0_103 = arith.constant 0 : index
    %562 = vector.load %arg8[%561, %c0_102, %c0_103] : memref<11x2x1xf32, #tpu.memory_space<vmem>>, vector<1x2x1xf32>
    %563 = vector.shape_cast %562 : vector<1x2x1xf32> to vector<2x1xf32>
    %564 = vector.shape_cast %559 : vector<2x1xf32> to vector<1x2x1xf32>
    tpu.vector_store %arg8[%561, %c0_102, %c0_103], %564 {strides = array<i32>} : memref<11x2x1xf32, #tpu.memory_space<vmem>>, vector<1x2x1xf32>,
    %c2_i32_104 = arith.constant 2 : i32
    %565 = vector.broadcast %559 : vector<2x1xf32> to vector<2x128xf32>
    %566 = vector.broadcast %0 : vector<1x128xf32> to vector<2x128xf32>
    %567 = arith.mulf %565, %566 : vector<2x128xf32>
    %cst_105 = arith.constant dense<0.000000e+00> : vector<2x128xf32>
    %568 = tpu.matmul %533, %1, %cst_105 {dimension_numbers = #tpu.dot_dimension_numbers<[1], [0], [0], [1], [0, 0, 1, 1], [], []>} : vector<2x32xf32>, vector<32x128xf32>, vector<2x128xf32> -> vector<2x128xf32>
    %569 = arith.addf %567, %568 : vector<2x128xf32>
    %570 = vector.broadcast %2 : vector<1x128xf32> to vector<2x128xf32>
    %571 = arith.addf %569, %570 : vector<2x128xf32>
    %572 = vector.extract_strided_slice %571 {offsets = [0, 0], sizes = [2, 96], strides = [1, 1]} : vector<2x128xf32> to vector<2x96xf32>
    %573 = arith.negf %572 : vector<2x96xf32>
    %574 = math.exp %573 : vector<2x96xf32>
    %cst_106 = arith.constant 1.000000e+00 : f32
    %575 = vector.broadcast %cst_106 : f32 to vector<2x96xf32>
    %576 = arith.addf %575, %574 : vector<2x96xf32>
    %577 = arith.divf %575, %576 : vector<2x96xf32>
    %578 = vector.extract_strided_slice %571 {offsets = [0, 96], sizes = [2, 32], strides = [1, 1]} : vector<2x128xf32> to vector<2x32xf32>
    %579 = math.tanh %578 : vector<2x32xf32>
    %580 = vector.extract_strided_slice %577 {offsets = [0, 0], sizes = [2, 32], strides = [1, 1]} : vector<2x96xf32> to vector<2x32xf32>
    %581 = vector.extract_strided_slice %577 {offsets = [0, 32], sizes = [2, 32], strides = [1, 1]} : vector<2x96xf32> to vector<2x32xf32>
    %582 = vector.extract_strided_slice %577 {offsets = [0, 64], sizes = [2, 32], strides = [1, 1]} : vector<2x96xf32> to vector<2x32xf32>
    %583 = arith.mulf %581, %531 : vector<2x32xf32>
    %584 = arith.mulf %580, %579 : vector<2x32xf32>
    %585 = arith.addf %583, %584 : vector<2x32xf32>
    %586 = math.tanh %585 : vector<2x32xf32>
    %587 = arith.mulf %582, %586 : vector<2x32xf32>
    %588 = tpu.concatenate %587, %553 in 1 : vector<2x32xf32>, vector<2x32xf32> -> vector<2x64xf32>
    %cst_107 = arith.constant dense<0.000000e+00> : vector<2x128xf32>
    %589 = tpu.matmul %588, %3, %cst_107 {dimension_numbers = #tpu.dot_dimension_numbers<[1], [0], [0], [1], [0, 0, 1, 1], [], []>} : vector<2x64xf32>, vector<64x128xf32>, vector<2x128xf32> -> vector<2x128xf32>
    %590 = vector.broadcast %4 : vector<1x128xf32> to vector<2x128xf32>
    %591 = arith.addf %589, %590 : vector<2x128xf32>
    %592 = vector.extract_strided_slice %591 {offsets = [0, 0], sizes = [2, 96], strides = [1, 1]} : vector<2x128xf32> to vector<2x96xf32>
    %593 = arith.negf %592 : vector<2x96xf32>
    %594 = math.exp %593 : vector<2x96xf32>
    %cst_108 = arith.constant 1.000000e+00 : f32
    %595 = vector.broadcast %cst_108 : f32 to vector<2x96xf32>
    %596 = arith.addf %595, %594 : vector<2x96xf32>
    %597 = arith.divf %595, %596 : vector<2x96xf32>
    %598 = vector.extract_strided_slice %591 {offsets = [0, 96], sizes = [2, 32], strides = [1, 1]} : vector<2x128xf32> to vector<2x32xf32>
    %599 = math.tanh %598 : vector<2x32xf32>
    %600 = vector.extract_strided_slice %597 {offsets = [0, 0], sizes = [2, 32], strides = [1, 1]} : vector<2x96xf32> to vector<2x32xf32>
    %601 = vector.extract_strided_slice %597 {offsets = [0, 32], sizes = [2, 32], strides = [1, 1]} : vector<2x96xf32> to vector<2x32xf32>
    %602 = vector.extract_strided_slice %597 {offsets = [0, 64], sizes = [2, 32], strides = [1, 1]} : vector<2x96xf32> to vector<2x32xf32>
    %603 = arith.mulf %601, %551 : vector<2x32xf32>
    %604 = arith.mulf %600, %599 : vector<2x32xf32>
    %605 = arith.addf %603, %604 : vector<2x32xf32>
    %606 = math.tanh %605 : vector<2x32xf32>
    %607 = arith.mulf %602, %606 : vector<2x32xf32>
    %608 = vector.broadcast %5 : vector<1x32xf32> to vector<2x32xf32>
    %609 = arith.mulf %607, %608 : vector<2x32xf32>
    %cst_109 = arith.constant dense<0.000000e+00> : vector<2xf32>
    %610 = vector.multi_reduction <add>, %609, %cst_109 [1] : vector<2x32xf32> to vector<2xf32>
    %611 = vector.shape_cast %610 : vector<2xf32> to vector<2x1xf32>
    %612 = vector.broadcast %6 : vector<1x1xf32> to vector<2x1xf32>
    %613 = arith.addf %611, %612 : vector<2x1xf32>
    %c8_i32_110 = arith.constant 8 : i32
    %614 = arith.addi %c8_i32_110, %c2_i32_104 : i32
    %615 = arith.index_cast %614 : i32 to index
    %c0_111 = arith.constant 0 : index
    %c0_112 = arith.constant 0 : index
    %616 = vector.load %arg8[%615, %c0_111, %c0_112] : memref<11x2x1xf32, #tpu.memory_space<vmem>>, vector<1x2x1xf32>
    %617 = vector.shape_cast %616 : vector<1x2x1xf32> to vector<2x1xf32>
    %618 = vector.shape_cast %613 : vector<2x1xf32> to vector<1x2x1xf32>
    tpu.vector_store %arg8[%615, %c0_111, %c0_112], %618 {strides = array<i32>} : memref<11x2x1xf32, #tpu.memory_space<vmem>>, vector<1x2x1xf32>,
    %c3_i32_113 = arith.constant 3 : i32
    return
  }
}

</mosaic_0001>

<llo_original>
// kernel: lstm_predictor.1
$region0: #{lstm_predictor.1}
  #allocation0 [shape = 'u32[]', space=smem, size = 0x4, offset = 0x4, fixed_abs, tag = 'smem constant byte address 0x4 - core index']
  #allocation1 [shape = 'u32[72,128]{1,0:T(1,128)}', space=vmem, size = 0x9000, scoped, tag = 'internal scratch']
  #allocation2 [shape = 'f32[1,1]{1,0:T(1,128)S(1)}', space=vmem, size = 0x200, scoped, tag = 'scoped memory for lstm_predictor.1']
  %s0 = inlined_call_operand.vmem [shape: f32[8,2,1], index: 0, kind: input, shape index: {}]
  %s1 = inlined_call_operand.vmem [shape: f32[1,128], index: 1, kind: input, shape index: {}]
  %s2 = inlined_call_operand.vmem [shape: f32[32,128], index: 2, kind: input, shape index: {}]
  %s3 = inlined_call_operand.vmem [shape: f32[1,128], index: 3, kind: input, shape index: {}]
  %s4 = inlined_call_operand.vmem [shape: f32[64,128], index: 4, kind: input, shape index: {}]
  %s5 = inlined_call_operand.vmem [shape: f32[1,128], index: 5, kind: input, shape index: {}]
  %s6 = inlined_call_operand.vmem [shape: f32[1,32], index: 6, kind: input, shape index: {}]
  %s7 = inlined_call_operand.<no memory space> [shape: f32[1,1], index: 7, kind: input, shape index: {}]
  %s8 = inlined_call_operand.vmem [shape: f32[11,2,1], index: 8, kind: output, shape index: {}]
  %s9 = sld [smem:[#allocation0]]
  $region42: #{lstm_predictor.1} parent=0
    _
  %s11 = ssub.s32 1, %s9
  %s12 = scalar_select 0, %s11, %s9
  %v13 = vstv %s7
  %14 = vst [vmem:[#allocation2] sm:$0x1] %v13
  // Predicated region
  $region2: #{lstm_predictor.1} parent=0 // pred_check
    _
  $region3: #{lstm_predictor.1} parent=0 // pred_check_branch
    %16 = sbr.rel (0) target = $region5
  $region4: #{lstm_predictor.1} parent=0 // pred_region
    _
  $region5: #{lstm_predictor.1} parent=0 // pred_fallthru
    _
  // Predicated region
  $region6: #{lstm_predictor.1} parent=0 // pred_check
    _
  $region7: #{lstm_predictor.1} parent=0 // pred_check_branch
    %18 = sbr.rel (0) target = $region9
  $region8: #{lstm_predictor.1} parent=0 // pred_region
    _
  $region9: #{lstm_predictor.1} parent=0 // pred_fallthru
    _
  // Predicated region
  $region10: #{lstm_predictor.1} parent=0 // pred_check
    _
  $region11: #{lstm_predictor.1} parent=0 // pred_check_branch
    %20 = sbr.rel (0) target = $region13
  $region12: #{lstm_predictor.1} parent=0 // pred_region
    _
  $region13: #{lstm_predictor.1} parent=0 // pred_fallthru
    _
  // Predicated region
  $region14: #{lstm_predictor.1} parent=0 // pred_check
    _
  $region15: #{lstm_predictor.1} parent=0 // pred_check_branch
    %22 = sbr.rel (0) target = $region17
  $region16: #{lstm_predictor.1} parent=0 // pred_region
    _
  $region17: #{lstm_predictor.1} parent=0 // pred_fallthru
    _
  // Predicated region
  $region18: #{lstm_predictor.1} parent=0 // pred_check
    _
  $region19: #{lstm_predictor.1} parent=0 // pred_check_branch
    %24 = sbr.rel (0) target = $region21
  $region20: #{lstm_predictor.1} parent=0 // pred_region
    _
  $region21: #{lstm_predictor.1} parent=0 // pred_fallthru
    _
  // Predicated region
  $region22: #{lstm_predictor.1} parent=0 // pred_check
    _
  $region23: #{lstm_predictor.1} parent=0 // pred_check_branch
    %26 = sbr.rel (0) target = $region25
  $region24: #{lstm_predictor.1} parent=0 // pred_region
    _
  $region25: #{lstm_predictor.1} parent=0 // pred_fallthru
    _
  // Predicated region
  $region26: #{lstm_predictor.1} parent=0 // pred_check
    _
  $region27: #{lstm_predictor.1} parent=0 // pred_check_branch
    %28 = sbr.rel (0) target = $region29
  $region28: #{lstm_predictor.1} parent=0 // pred_region
    _
  $region29: #{lstm_predictor.1} parent=0 // pred_fallthru
    _
  // Predicated region
  $region30: #{lstm_predictor.1} parent=0 // pred_check
    _
  $region31: #{lstm_predictor.1} parent=0 // pred_check_branch
    %30 = sbr.rel (0) target = $region33
  $region32: #{lstm_predictor.1} parent=0 // pred_region
    _
  $region33: #{lstm_predictor.1} parent=0 // pred_fallthru
    _
  %v31 = vld [vmem:[%s1] sm:$0x1]
  %v32 = vld [vmem:[%s2] sm:$0xff]
  %v33 = vld [vmem:[%s2 + $0x8] sm:$0xff]
  %v34 = vld [vmem:[%s2 + $0x10] sm:$0xff]
  %v35 = vld [vmem:[%s2 + $0x18] sm:$0xff]
  %v36 = vld [vmem:[%s3] sm:$0x1]
  %v37 = vld [vmem:[%s4] sm:$0xff]
  %v38 = vld [vmem:[%s4 + $0x8] sm:$0xff]
  %v39 = vld [vmem:[%s4 + $0x10] sm:$0xff]
  %v40 = vld [vmem:[%s4 + $0x18] sm:$0xff]
  %v41 = vld [vmem:[%s4 + $0x20] sm:$0xff]
  %v42 = vld [vmem:[%s4 + $0x28] sm:$0xff]
  %v43 = vld [vmem:[%s4 + $0x30] sm:$0xff]
  %v44 = vld [vmem:[%s4 + $0x38] sm:$0xff]
  %v45 = vld [vmem:[%s5] sm:$0x1]
  %v46 = vld [vmem:[%s6] sm:$0x1]
  %v47 = vld [vmem:[#allocation2] sm:$0x1]
  %v48 = vld [vmem:[%s0] sm:$0x3]
  %50 = vset.pattern.permute.xlu0 0
  %51 = vperm.xlu0 %50, %v48
  %v52 = vpop.permute.xlu0 %51
  %v55 = vperm.slane %v31, 0
  %v57 = vmul.f32 %v52, %v55
  %vm58 = vcmask 261120
  %v60 = vsel %vm58, 0.0, 0
  %62 = vmatpush.msra.mxu0 0.0
  %63 = vmatpush.msra.mxu0 0.0
  %64 = vmatpush.msra.mxu0 0.0
  %65 = vmatpush.msra.mxu0 0.0
  %66 = vmatpush.msra.mxu0 0.0
  %67 = vmatpush.msra.mxu0 0.0
  %68 = vmatpush.msra.mxu0 0.0
  %69 = vmatpush.msra.mxu0 0.0
  %70 = vmatpush.msra.mxu0 0.0
  %71 = vmatpush.msra.mxu0 0.0
  %72 = vmatpush.msra.mxu0 0.0
  %73 = vmatpush.msra.mxu0 0.0
  %74 = vmatpush.msra.mxu0 %v35
  %75 = vmatpush.msra.mxu0 %v34
  %76 = vmatpush.msra.mxu0 %v33
  %77 = vmatpush.msra.mxu0 %v32
  %78 = vmatmul.f32.gmra.mxu0 %v60
  %v79 = vpop.f32.mrf.mxu0
  %v80 = vadd.f32 0.0, %v79
  %81 = vdwg.mxu0
  %v82 = vadd.f32 %v57, %v80
  %v84 = vperm.slane %v36, 0
  %v86 = vadd.f32 %v82, %v84
  %v87 = vxor.u32 %v86, 2147483648
  %v88 = vmul.f32 %v87, 1.442695
  %v89 = vpow.pop %v88
  %v90 = vadd.f32 %v89, 1.0
  %v91 = vrcp.pop %v90
  %v92 = vmul.f32 %v90, %v91
  %v93 = vsub.f32 1.0, %v92
  %v94 = vmul.f32 %v91, %v93
  %v95 = vadd.f32 %v91, %v94
  %vm96 = vweird.f32 %v90
  %vm97 = vweird.f32 %v91
  %vm98 = vmor %vm96, %vm97
  %v99 = vsel %vm98, %v91, %v95
  %v100 = vand.u32 2147483647, %v90
  %vm101 = vcmp.eq.f32.partialorder %v100, 8.507059e+37
  %v102 = vand.u32 %v90, 2147483648
  %v103 = vor.u32 1.1754944e-38, %v102
  %v104 = vsel %vm101, %v103, %v99
  %v105 = vmul.f32 1.0, %v104
  %v106 = vtanh.pop %v86
  %v107 = vmul.f32 %v105, 0.0
  %109 = vrot.lane.b32.xlu0 %v106, 32
  %v110 = vpop.permute.xlu0 %109
  %v112 = vmul.f32 %v105, %v110
  %114 = vrot.lane.b32.xlu0 %v112, 32
  %v115 = vpop.permute.xlu0 %114
  %v117 = vadd.f32 %v107, %v115
  %v118 = vtanh.pop %v117
  %120 = vrot.lane.b32.xlu0 %v118, 32
  %v121 = vpop.permute.xlu0 %120
  %v123 = vmul.f32 %v105, %v121
  %125 = vrot.lane.b32.xlu0 %v123, 64
  %v126 = vpop.permute.xlu0 %125
  %v128 = vsel %vm58, %v126, 0.0
  %v130 = vperm.slane %v45, 0
  %vm132 = vcmask 523264
  %v134 = vsel %vm132, %v128, 0
  %136 = vmatpush.msra.mxu0 0.0
  %137 = vmatpush.msra.mxu0 0.0
  %138 = vmatpush.msra.mxu0 0.0
  %139 = vmatpush.msra.mxu0 0.0
  %140 = vmatpush.msra.mxu0 0.0
  %141 = vmatpush.msra.mxu0 0.0
  %142 = vmatpush.msra.mxu0 0.0
  %143 = vmatpush.msra.mxu0 0.0
  %144 = vmatpush.msra.mxu0 %v44
  %145 = vmatpush.msra.mxu0 %v43
  %146 = vmatpush.msra.mxu0 %v42
  %147 = vmatpush.msra.mxu0 %v41
  %148 = vmatpush.msra.mxu0 %v40
  %149 = vmatpush.msra.mxu0 %v39
  %150 = vmatpush.msra.mxu0 %v38
  %151 = vmatpush.msra.mxu0 %v37
  %152 = vmatmul.f32.gmra.mxu0 %v134
  %v153 = vpop.f32.mrf.mxu0
  %v154 = vadd.f32 %v130, %v153
  %155 = vdwg.mxu0
  %v156 = vxor.u32 %v154, 2147483648
  %v157 = vmul.f32 %v156, 1.442695
  %v158 = vpow.pop %v157
  %v159 = vadd.f32 %v158, 1.0
  %v160 = vrcp.pop %v159
  %v161 = vmul.f32 %v159, %v160
  %v162 = vsub.f32 1.0, %v161
  %v163 = vmul.f32 %v160, %v162
  %v164 = vadd.f32 %v160, %v163
  %vm165 = vweird.f32 %v159
  %vm166 = vweird.f32 %v160
  %vm167 = vmor %vm165, %vm166
  %v168 = vsel %vm167, %v160, %v164
  %v169 = vand.u32 2147483647, %v159
  %vm170 = vcmp.eq.f32.partialorder %v169, 8.507059e+37
  %v171 = vand.u32 %v159, 2147483648
  %v172 = vor.u32 1.1754944e-38, %v171
  %v173 = vsel %vm170, %v172, %v168
  %v174 = vmul.f32 1.0, %v173
  %v175 = vtanh.pop %v154
  %v176 = vmul.f32 %v174, 0.0
  %178 = vrot.lane.b32.xlu0 %v175, 32
  %v179 = vpop.permute.xlu0 %178
  %v181 = vmul.f32 %v174, %v179
  %183 = vrot.lane.b32.xlu0 %v181, 32
  %v184 = vpop.permute.xlu0 %183
  %v186 = vadd.f32 %v176, %v184
  %v187 = vtanh.pop %v186
  %189 = vrot.lane.b32.xlu0 %v187, 32
  %v190 = vpop.permute.xlu0 %189
  %v192 = vmul.f32 %v174, %v190
  %v194 = vperm.slane %v46, 0
  %195 = vrot.lane.b32.xlu0 %v194, 64
  %v196 = vpop.permute.xlu0 %195
  %v198 = vmul.f32 %v192, %v196
  %200 = vrot.lane.b32.xlu0 %v198, 64
  %v201 = vpop.permute.xlu0 %200
  %vm203 = vcmask 254976
  %v204 = vsel %vm203, %v201, 0.0
  %205 = vadd.xlane.f32.xlu0 %v204
  %v206 = vpop.xlane.xlu0 %205
  %v208 = vperm.slane %v47, 0
  %v210 = vadd.f32 %v206, %v208
  %vm211 = vcmask 1024
  %212 = vst.msk [vmem:[%s8] sm:$0x3] %vm211, %v210
  %s213 = scalar_lea.vmem %s0, 2
  %v214 = vld [vmem:[%s213] sm:$0x3]
  %216 = vset.pattern.permute.xlu0 0
  %217 = vperm.xlu0 %216, %v214
  %v218 = vpop.permute.xlu0 %217
  %v220 = vmul.f32 %v218, %v55
  %v221 = vsel %vm58, %v126, 0
  %223 = vmatpush.msra.mxu0 0.0
  %224 = vmatpush.msra.mxu0 0.0
  %225 = vmatpush.msra.mxu0 0.0
  %226 = vmatpush.msra.mxu0 0.0
  %227 = vmatpush.msra.mxu0 0.0
  %228 = vmatpush.msra.mxu0 0.0
  %229 = vmatpush.msra.mxu0 0.0
  %230 = vmatpush.msra.mxu0 0.0
  %231 = vmatpush.msra.mxu0 0.0
  %232 = vmatpush.msra.mxu0 0.0
  %233 = vmatpush.msra.mxu0 0.0
  %234 = vmatpush.msra.mxu0 0.0
  %235 = vmatpush.msra.mxu0 %v35
  %236 = vmatpush.msra.mxu0 %v34
  %237 = vmatpush.msra.mxu0 %v33
  %238 = vmatpush.msra.mxu0 %v32
  %239 = vmatmul.f32.gmra.mxu0 %v221
  %v240 = vpop.f32.mrf.mxu0
  %v241 = vadd.f32 0.0, %v240
  %242 = vdwg.mxu0
  %v243 = vadd.f32 %v220, %v241
  %v244 = vadd.f32 %v243, %v84
  %v245 = vxor.u32 %v244, 2147483648
  %v246 = vmul.f32 %v245, 1.442695
  %v247 = vpow.pop %v246
  %v248 = vadd.f32 %v247, 1.0
  %v249 = vrcp.pop %v248
  %v250 = vmul.f32 %v248, %v249
  %v251 = vsub.f32 1.0, %v250
  %v252 = vmul.f32 %v249, %v251
  %v253 = vadd.f32 %v249, %v252
  %vm254 = vweird.f32 %v248
  %vm255 = vweird.f32 %v249
  %vm256 = vmor %vm254, %vm255
  %v257 = vsel %vm256, %v249, %v253
  %v258 = vand.u32 2147483647, %v248
  %vm259 = vcmp.eq.f32.partialorder %v258, 8.507059e+37
  %v260 = vand.u32 %v248, 2147483648
  %v261 = vor.u32 1.1754944e-38, %v260
  %v262 = vsel %vm259, %v261, %v257
  %v263 = vmul.f32 1.0, %v262
  %v264 = vtanh.pop %v244
  %v265 = vmul.f32 %v263, %v117
  %267 = vrot.lane.b32.xlu0 %v264, 32
  %v268 = vpop.permute.xlu0 %267
  %v270 = vmul.f32 %v263, %v268
  %272 = vrot.lane.b32.xlu0 %v270, 32
  %v273 = vpop.permute.xlu0 %272
  %v275 = vadd.f32 %v265, %v273
  %v276 = vtanh.pop %v275
  %278 = vrot.lane.b32.xlu0 %v276, 32
  %v279 = vpop.permute.xlu0 %278
  %v281 = vmul.f32 %v263, %v279
  %283 = vrot.lane.b32.xlu0 %v281, 64
  %v284 = vpop.permute.xlu0 %283
  %287 = vrot.lane.b32.xlu0 %v192, 96
  %v288 = vpop.permute.xlu0 %287
  %v290 = vsel %vm58, %v284, %v288
  %v292 = vsel %vm132, %v290, 0
  %294 = vmatpush.msra.mxu0 0.0
  %295 = vmatpush.msra.mxu0 0.0
  %296 = vmatpush.msra.mxu0 0.0
  %297 = vmatpush.msra.mxu0 0.0
  %298 = vmatpush.msra.mxu0 0.0
  %299 = vmatpush.msra.mxu0 0.0
  %300 = vmatpush.msra.mxu0 0.0
  %301 = vmatpush.msra.mxu0 0.0
  %302 = vmatpush.msra.mxu0 %v44
  %303 = vmatpush.msra.mxu0 %v43
  %304 = vmatpush.msra.mxu0 %v42
  %305 = vmatpush.msra.mxu0 %v41
  %306 = vmatpush.msra.mxu0 %v40
  %307 = vmatpush.msra.mxu0 %v39
  %308 = vmatpush.msra.mxu0 %v38
  %309 = vmatpush.msra.mxu0 %v37
  %310 = vmatmul.f32.gmra.mxu0 %v292
  %v311 = vpop.f32.mrf.mxu0
  %v312 = vadd.f32 %v130, %v311
  %313 = vdwg.mxu0
  %v314 = vxor.u32 %v312, 2147483648
  %v315 = vmul.f32 %v314, 1.442695
  %v316 = vpow.pop %v315
  %v317 = vadd.f32 %v316, 1.0
  %v318 = vrcp.pop %v317
  %v319 = vmul.f32 %v317, %v318
  %v320 = vsub.f32 1.0, %v319
  %v321 = vmul.f32 %v318, %v320
  %v322 = vadd.f32 %v318, %v321
  %vm323 = vweird.f32 %v317
  %vm324 = vweird.f32 %v318
  %vm325 = vmor %vm323, %vm324
  %v326 = vsel %vm325, %v318, %v322
  %v327 = vand.u32 2147483647, %v317
  %vm328 = vcmp.eq.f32.partialorder %v327, 8.507059e+37
  %v329 = vand.u32 %v317, 2147483648
  %v330 = vor.u32 1.1754944e-38, %v329
  %v331 = vsel %vm328, %v330, %v326
  %v332 = vmul.f32 1.0, %v331
  %v333 = vtanh.pop %v312
  %v334 = vmul.f32 %v332, %v186
  %336 = vrot.lane.b32.xlu0 %v333, 32
  %v337 = vpop.permute.xlu0 %336
  %v339 = vmul.f32 %v332, %v337
  %341 = vrot.lane.b32.xlu0 %v339, 32
  %v342 = vpop.permute.xlu0 %341
  %v344 = vadd.f32 %v334, %v342
  %v345 = vtanh.pop %v344
  %347 = vrot.lane.b32.xlu0 %v345, 32
  %v348 = vpop.permute.xlu0 %347
  %v350 = vmul.f32 %v332, %v348
  %v351 = vmul.f32 %v350, %v196
  %353 = vrot.lane.b32.xlu0 %v351, 64
  %v354 = vpop.permute.xlu0 %353
  %v356 = vsel %vm203, %v354, 0.0
  %357 = vadd.xlane.f32.xlu0 %v356
  %v358 = vpop.xlane.xlu0 %357
  %v359 = vadd.f32 %v358, %v208
  %s360 = scalar_lea.vmem %s8, 2
  %361 = vst.msk [vmem:[%s360] sm:$0x3] %vm211, %v359
  %s362 = scalar_lea.vmem %s0, 4
  %v363 = vld [vmem:[%s362] sm:$0x3]
  %365 = vset.pattern.permute.xlu0 0
  %366 = vperm.xlu0 %365, %v363
  %v367 = vpop.permute.xlu0 %366
  %v369 = vmul.f32 %v367, %v55
  %v370 = vsel %vm58, %v284, 0
  %372 = vmatpush.msra.mxu0 0.0
  %373 = vmatpush.msra.mxu0 0.0
  %374 = vmatpush.msra.mxu0 0.0
  %375 = vmatpush.msra.mxu0 0.0
  %376 = vmatpush.msra.mxu0 0.0
  %377 = vmatpush.msra.mxu0 0.0
  %378 = vmatpush.msra.mxu0 0.0
  %379 = vmatpush.msra.mxu0 0.0
  %380 = vmatpush.msra.mxu0 0.0
  %381 = vmatpush.msra.mxu0 0.0
  %382 = vmatpush.msra.mxu0 0.0
  %383 = vmatpush.msra.mxu0 0.0
  %384 = vmatpush.msra.mxu0 %v35
  %385 = vmatpush.msra.mxu0 %v34
  %386 = vmatpush.msra.mxu0 %v33
  %387 = vmatpush.msra.mxu0 %v32
  %388 = vmatmul.f32.gmra.mxu0 %v370
  %v389 = vpop.f32.mrf.mxu0
  %v390 = vadd.f32 0.0, %v389
  %391 = vdwg.mxu0
  %v392 = vadd.f32 %v369, %v390
  %v393 = vadd.f32 %v392, %v84
  %v394 = vxor.u32 %v393, 2147483648
  %v395 = vmul.f32 %v394, 1.442695
  %v396 = vpow.pop %v395
  %v397 = vadd.f32 %v396, 1.0
  %v398 = vrcp.pop %v397
  %v399 = vmul.f32 %v397, %v398
  %v400 = vsub.f32 1.0, %v399
  %v401 = vmul.f32 %v398, %v400
  %v402 = vadd.f32 %v398, %v401
  %vm403 = vweird.f32 %v397
  %vm404 = vweird.f32 %v398
  %vm405 = vmor %vm403, %vm404
  %v406 = vsel %vm405, %v398, %v402
  %v407 = vand.u32 2147483647, %v397
  %vm408 = vcmp.eq.f32.partialorder %v407, 8.507059e+37
  %v409 = vand.u32 %v397, 2147483648
  %v410 = vor.u32 1.1754944e-38, %v409
  %v411 = vsel %vm408, %v410, %v406
  %v412 = vmul.f32 1.0, %v411
  %v413 = vtanh.pop %v393
  %v414 = vmul.f32 %v412, %v275
  %416 = vrot.lane.b32.xlu0 %v413, 32
  %v417 = vpop.permute.xlu0 %416
  %v419 = vmul.f32 %v412, %v417
  %421 = vrot.lane.b32.xlu0 %v419, 32
  %v422 = vpop.permute.xlu0 %421
  %v424 = vadd.f32 %v414, %v422
  %v425 = vtanh.pop %v424
  %427 = vrot.lane.b32.xlu0 %v425, 32
  %v428 = vpop.permute.xlu0 %427
  %v430 = vmul.f32 %v412, %v428
  %432 = vrot.lane.b32.xlu0 %v430, 64
  %v433 = vpop.permute.xlu0 %432
  %436 = vrot.lane.b32.xlu0 %v350, 96
  %v437 = vpop.permute.xlu0 %436
  %v439 = vsel %vm58, %v433, %v437
  %v441 = vsel %vm132, %v439, 0
  %443 = vmatpush.msra.mxu0 0.0
  %444 = vmatpush.msra.mxu0 0.0
  %445 = vmatpush.msra.mxu0 0.0
  %446 = vmatpush.msra.mxu0 0.0
  %447 = vmatpush.msra.mxu0 0.0
  %448 = vmatpush.msra.mxu0 0.0
  %449 = vmatpush.msra.mxu0 0.0
  %450 = vmatpush.msra.mxu0 0.0
  %451 = vmatpush.msra.mxu0 %v44
  %452 = vmatpush.msra.mxu0 %v43
  %453 = vmatpush.msra.mxu0 %v42
  %454 = vmatpush.msra.mxu0 %v41
  %455 = vmatpush.msra.mxu0 %v40
  %456 = vmatpush.msra.mxu0 %v39
  %457 = vmatpush.msra.mxu0 %v38
  %458 = vmatpush.msra.mxu0 %v37
  %459 = vmatmul.f32.gmra.mxu0 %v441
  %v460 = vpop.f32.mrf.mxu0
  %v461 = vadd.f32 %v130, %v460
  %462 = vdwg.mxu0
  %v463 = vxor.u32 %v461, 2147483648
  %v464 = vmul.f32 %v463, 1.442695
  %v465 = vpow.pop %v464
  %v466 = vadd.f32 %v465, 1.0
  %v467 = vrcp.pop %v466
  %v468 = vmul.f32 %v466, %v467
  %v469 = vsub.f32 1.0, %v468
  %v470 = vmul.f32 %v467, %v469
  %v471 = vadd.f32 %v467, %v470
  %vm472 = vweird.f32 %v466
  %vm473 = vweird.f32 %v467
  %vm474 = vmor %vm472, %vm473
  %v475 = vsel %vm474, %v467, %v471
  %v476 = vand.u32 2147483647, %v466
  %vm477 = vcmp.eq.f32.partialorder %v476, 8.507059e+37
  %v478 = vand.u32 %v466, 2147483648
  %v479 = vor.u32 1.1754944e-38, %v478
  %v480 = vsel %vm477, %v479, %v475
  %v481 = vmul.f32 1.0, %v480
  %v482 = vtanh.pop %v461
  %v483 = vmul.f32 %v481, %v344
  %485 = vrot.lane.b32.xlu0 %v482, 32
  %v486 = vpop.permute.xlu0 %485
  %v488 = vmul.f32 %v481, %v486
  %490 = vrot.lane.b32.xlu0 %v488, 32
  %v491 = vpop.permute.xlu0 %490
  %v493 = vadd.f32 %v483, %v491
  %v494 = vtanh.pop %v493
  %496 = vrot.lane.b32.xlu0 %v494, 32
  %v497 = vpop.permute.xlu0 %496
  %v499 = vmul.f32 %v481, %v497
  %v500 = vmul.f32 %v499, %v196
  %502 = vrot.lane.b32.xlu0 %v500, 64
  %v503 = vpop.permute.xlu0 %502
  %v505 = vsel %vm203, %v503, 0.0
  %506 = vadd.xlane.f32.xlu0 %v505
  %v507 = vpop.xlane.xlu0 %506
  %v508 = vadd.f32 %v507, %v208
  %s509 = scalar_lea.vmem %s8, 4
  %510 = vst.msk [vmem:[%s509] sm:$0x3] %vm211, %v508
  %s511 = scalar_lea.vmem %s0, 6
  %v512 = vld [vmem:[%s511] sm:$0x3]
  %514 = vset.pattern.permute.xlu0 0
  %515 = vperm.xlu0 %514, %v512
  %v516 = vpop.permute.xlu0 %515
  %v518 = vmul.f32 %v516, %v55
  %v519 = vsel %vm58, %v433, 0
  %521 = vmatpush.msra.mxu0 0.0
  %522 = vmatpush.msra.mxu0 0.0
  %523 = vmatpush.msra.mxu0 0.0
  %524 = vmatpush.msra.mxu0 0.0
  %525 = vmatpush.msra.mxu0 0.0
  %526 = vmatpush.msra.mxu0 0.0
  %527 = vmatpush.msra.mxu0 0.0
  %528 = vmatpush.msra.mxu0 0.0
  %529 = vmatpush.msra.mxu0 0.0
  %530 = vmatpush.msra.mxu0 0.0
  %531 = vmatpush.msra.mxu0 0.0
  %532 = vmatpush.msra.mxu0 0.0
  %533 = vmatpush.msra.mxu0 %v35
  %534 = vmatpush.msra.mxu0 %v34
  %535 = vmatpush.msra.mxu0 %v33
  %536 = vmatpush.msra.mxu0 %v32
  %537 = vmatmul.f32.gmra.mxu0 %v519
  %v538 = vpop.f32.mrf.mxu0
  %v539 = vadd.f32 0.0, %v538
  %540 = vdwg.mxu0
  %v541 = vadd.f32 %v518, %v539
  %v542 = vadd.f32 %v541, %v84
  %v543 = vxor.u32 %v542, 2147483648
  %v544 = vmul.f32 %v543, 1.442695
  %v545 = vpow.pop %v544
  %v546 = vadd.f32 %v545, 1.0
  %v547 = vrcp.pop %v546
  %v548 = vmul.f32 %v546, %v547
  %v549 = vsub.f32 1.0, %v548
  %v550 = vmul.f32 %v547, %v549
  %v551 = vadd.f32 %v547, %v550
  %vm552 = vweird.f32 %v546
  %vm553 = vweird.f32 %v547
  %vm554 = vmor %vm552, %vm553
  %v555 = vsel %vm554, %v547, %v551
  %v556 = vand.u32 2147483647, %v546
  %vm557 = vcmp.eq.f32.partialorder %v556, 8.507059e+37
  %v558 = vand.u32 %v546, 2147483648
  %v559 = vor.u32 1.1754944e-38, %v558
  %v560 = vsel %vm557, %v559, %v555
  %v561 = vmul.f32 1.0, %v560
  %v562 = vtanh.pop %v542
  %v563 = vmul.f32 %v561, %v424
  %565 = vrot.lane.b32.xlu0 %v562, 32
  %v566 = vpop.permute.xlu0 %565
  %v568 = vmul.f32 %v561, %v566
  %570 = vrot.lane.b32.xlu0 %v568, 32
  %v571 = vpop.permute.xlu0 %570
  %v573 = vadd.f32 %v563, %v571
  %v574 = vtanh.pop %v573
  %576 = vrot.lane.b32.xlu0 %v574, 32
  %v577 = vpop.permute.xlu0 %576
  %v579 = vmul.f32 %v561, %v577
  %581 = vrot.lane.b32.xlu0 %v579, 64
  %v582 = vpop.permute.xlu0 %581
  %585 = vrot.lane.b32.xlu0 %v499, 96
  %v586 = vpop.permute.xlu0 %585
  %v588 = vsel %vm58, %v582, %v586
  %v590 = vsel %vm132, %v588, 0
  %592 = vmatpush.msra.mxu0 0.0
  %593 = vmatpush.msra.mxu0 0.0
  %594 = vmatpush.msra.mxu0 0.0
  %595 = vmatpush.msra.mxu0 0.0
  %596 = vmatpush.msra.mxu0 0.0
  %597 = vmatpush.msra.mxu0 0.0
  %598 = vmatpush.msra.mxu0 0.0
  %599 = vmatpush.msra.mxu0 0.0
  %600 = vmatpush.msra.mxu0 %v44
  %601 = vmatpush.msra.mxu0 %v43
  %602 = vmatpush.msra.mxu0 %v42
  %603 = vmatpush.msra.mxu0 %v41
  %604 = vmatpush.msra.mxu0 %v40
  %605 = vmatpush.msra.mxu0 %v39
  %606 = vmatpush.msra.mxu0 %v38
  %607 = vmatpush.msra.mxu0 %v37
  %608 = vmatmul.f32.gmra.mxu0 %v590
  %v609 = vpop.f32.mrf.mxu0
  %v610 = vadd.f32 %v130, %v609
  %611 = vdwg.mxu0
  %v612 = vxor.u32 %v610, 2147483648
  %v613 = vmul.f32 %v612, 1.442695
  %v614 = vpow.pop %v613
  %v615 = vadd.f32 %v614, 1.0
  %v616 = vrcp.pop %v615
  %v617 = vmul.f32 %v615, %v616
  %v618 = vsub.f32 1.0, %v617
  %v619 = vmul.f32 %v616, %v618
  %v620 = vadd.f32 %v616, %v619
  %vm621 = vweird.f32 %v615
  %vm622 = vweird.f32 %v616
  %vm623 = vmor %vm621, %vm622
  %v624 = vsel %vm623, %v616, %v620
  %v625 = vand.u32 2147483647, %v615
  %vm626 = vcmp.eq.f32.partialorder %v625, 8.507059e+37
  %v627 = vand.u32 %v615, 2147483648
  %v628 = vor.u32 1.1754944e-38, %v627
  %v629 = vsel %vm626, %v628, %v624
  %v630 = vmul.f32 1.0, %v629
  %v631 = vtanh.pop %v610
  %v632 = vmul.f32 %v630, %v493
  %634 = vrot.lane.b32.xlu0 %v631, 32
  %v635 = vpop.permute.xlu0 %634
  %v637 = vmul.f32 %v630, %v635
  %639 = vrot.lane.b32.xlu0 %v637, 32
  %v640 = vpop.permute.xlu0 %639
  %v642 = vadd.f32 %v632, %v640
  %v643 = vtanh.pop %v642
  %645 = vrot.lane.b32.xlu0 %v643, 32
  %v646 = vpop.permute.xlu0 %645
  %v648 = vmul.f32 %v630, %v646
  %v649 = vmul.f32 %v648, %v196
  %651 = vrot.lane.b32.xlu0 %v649, 64
  %v652 = vpop.permute.xlu0 %651
  %v654 = vsel %vm203, %v652, 0.0
  %655 = vadd.xlane.f32.xlu0 %v654
  %v656 = vpop.xlane.xlu0 %655
  %v657 = vadd.f32 %v656, %v208
  %s658 = scalar_lea.vmem %s8, 6
  %659 = vst.msk [vmem:[%s658] sm:$0x3] %vm211, %v657
  %s660 = scalar_lea.vmem %s0, 8
  %v661 = vld [vmem:[%s660] sm:$0x3]
  %663 = vset.pattern.permute.xlu0 0
  %664 = vperm.xlu0 %663, %v661
  %v665 = vpop.permute.xlu0 %664
  %v667 = vmul.f32 %v665, %v55
  %v668 = vsel %vm58, %v582, 0
  %670 = vmatpush.msra.mxu0 0.0
  %671 = vmatpush.msra.mxu0 0.0
  %672 = vmatpush.msra.mxu0 0.0
  %673 = vmatpush.msra.mxu0 0.0
  %674 = vmatpush.msra.mxu0 0.0
  %675 = vmatpush.msra.mxu0 0.0
  %676 = vmatpush.msra.mxu0 0.0
  %677 = vmatpush.msra.mxu0 0.0
  %678 = vmatpush.msra.mxu0 0.0
  %679 = vmatpush.msra.mxu0 0.0
  %680 = vmatpush.msra.mxu0 0.0
  %681 = vmatpush.msra.mxu0 0.0
  %682 = vmatpush.msra.mxu0 %v35
  %683 = vmatpush.msra.mxu0 %v34
  %684 = vmatpush.msra.mxu0 %v33
  %685 = vmatpush.msra.mxu0 %v32
  %686 = vmatmul.f32.gmra.mxu0 %v668
  %v687 = vpop.f32.mrf.mxu0
  %v688 = vadd.f32 0.0, %v687
  %689 = vdwg.mxu0
  %v690 = vadd.f32 %v667, %v688
  %v691 = vadd.f32 %v690, %v84
  %v692 = vxor.u32 %v691, 2147483648
  %v693 = vmul.f32 %v692, 1.442695
  %v694 = vpow.pop %v693
  %v695 = vadd.f32 %v694, 1.0
  %v696 = vrcp.pop %v695
  %v697 = vmul.f32 %v695, %v696
  %v698 = vsub.f32 1.0, %v697
  %v699 = vmul.f32 %v696, %v698
  %v700 = vadd.f32 %v696, %v699
  %vm701 = vweird.f32 %v695
  %vm702 = vweird.f32 %v696
  %vm703 = vmor %vm701, %vm702
  %v704 = vsel %vm703, %v696, %v700
  %v705 = vand.u32 2147483647, %v695
  %vm706 = vcmp.eq.f32.partialorder %v705, 8.507059e+37
  %v707 = vand.u32 %v695, 2147483648
  %v708 = vor.u32 1.1754944e-38, %v707
  %v709 = vsel %vm706, %v708, %v704
  %v710 = vmul.f32 1.0, %v709
  %v711 = vtanh.pop %v691
  %v712 = vmul.f32 %v710, %v573
  %714 = vrot.lane.b32.xlu0 %v711, 32
  %v715 = vpop.permute.xlu0 %714
  %v717 = vmul.f32 %v710, %v715
  %719 = vrot.lane.b32.xlu0 %v717, 32
  %v720 = vpop.permute.xlu0 %719
  %v722 = vadd.f32 %v712, %v720
  %v723 = vtanh.pop %v722
  %725 = vrot.lane.b32.xlu0 %v723, 32
  %v726 = vpop.permute.xlu0 %725
  %v728 = vmul.f32 %v710, %v726
  %730 = vrot.lane.b32.xlu0 %v728, 64
  %v731 = vpop.permute.xlu0 %730
  %734 = vrot.lane.b32.xlu0 %v648, 96
  %v735 = vpop.permute.xlu0 %734
  %v737 = vsel %vm58, %v731, %v735
  %v739 = vsel %vm132, %v737, 0
  %741 = vmatpush.msra.mxu0 0.0
  %742 = vmatpush.msra.mxu0 0.0
  %743 = vmatpush.msra.mxu0 0.0
  %744 = vmatpush.msra.mxu0 0.0
  %745 = vmatpush.msra.mxu0 0.0
  %746 = vmatpush.msra.mxu0 0.0
  %747 = vmatpush.msra.mxu0 0.0
  %748 = vmatpush.msra.mxu0 0.0
  %749 = vmatpush.msra.mxu0 %v44
  %750 = vmatpush.msra.mxu0 %v43
  %751 = vmatpush.msra.mxu0 %v42
  %752 = vmatpush.msra.mxu0 %v41
  %753 = vmatpush.msra.mxu0 %v40
  %754 = vmatpush.msra.mxu0 %v39
  %755 = vmatpush.msra.mxu0 %v38
  %756 = vmatpush.msra.mxu0 %v37
  %757 = vmatmul.f32.gmra.mxu0 %v739
  %v758 = vpop.f32.mrf.mxu0
  %v759 = vadd.f32 %v130, %v758
  %760 = vdwg.mxu0
  %v761 = vxor.u32 %v759, 2147483648
  %v762 = vmul.f32 %v761, 1.442695
  %v763 = vpow.pop %v762
  %v764 = vadd.f32 %v763, 1.0
  %v765 = vrcp.pop %v764
  %v766 = vmul.f32 %v764, %v765
  %v767 = vsub.f32 1.0, %v766
  %v768 = vmul.f32 %v765, %v767
  %v769 = vadd.f32 %v765, %v768
  %vm770 = vweird.f32 %v764
  %vm771 = vweird.f32 %v765
  %vm772 = vmor %vm770, %vm771
  %v773 = vsel %vm772, %v765, %v769
  %v774 = vand.u32 2147483647, %v764
  %vm775 = vcmp.eq.f32.partialorder %v774, 8.507059e+37
  %v776 = vand.u32 %v764, 2147483648
  %v777 = vor.u32 1.1754944e-38, %v776
  %v778 = vsel %vm775, %v777, %v773
  %v779 = vmul.f32 1.0, %v778
  %v780 = vtanh.pop %v759
  %v781 = vmul.f32 %v779, %v642
  %783 = vrot.lane.b32.xlu0 %v780, 32
  %v784 = vpop.permute.xlu0 %783
  %v786 = vmul.f32 %v779, %v784
  %788 = vrot.lane.b32.xlu0 %v786, 32
  %v789 = vpop.permute.xlu0 %788
  %v791 = vadd.f32 %v781, %v789
  %v792 = vtanh.pop %v791
  %794 = vrot.lane.b32.xlu0 %v792, 32
  %v795 = vpop.permute.xlu0 %794
  %v797 = vmul.f32 %v779, %v795
  %v798 = vmul.f32 %v797, %v196
  %800 = vrot.lane.b32.xlu0 %v798, 64
  %v801 = vpop.permute.xlu0 %800
  %v803 = vsel %vm203, %v801, 0.0
  %804 = vadd.xlane.f32.xlu0 %v803
  %v805 = vpop.xlane.xlu0 %804
  %v806 = vadd.f32 %v805, %v208
  %s807 = scalar_lea.vmem %s8, 8
  %808 = vst.msk [vmem:[%s807] sm:$0x3] %vm211, %v806
  %s809 = scalar_lea.vmem %s0, 10
  %v810 = vld [vmem:[%s809] sm:$0x3]
  %812 = vset.pattern.permute.xlu0 0
  %813 = vperm.xlu0 %812, %v810
  %v814 = vpop.permute.xlu0 %813
  %v816 = vmul.f32 %v814, %v55
  %v817 = vsel %vm58, %v731, 0
  %819 = vmatpush.msra.mxu0 0.0
  %820 = vmatpush.msra.mxu0 0.0
  %821 = vmatpush.msra.mxu0 0.0
  %822 = vmatpush.msra.mxu0 0.0
  %823 = vmatpush.msra.mxu0 0.0
  %824 = vmatpush.msra.mxu0 0.0
  %825 = vmatpush.msra.mxu0 0.0
  %826 = vmatpush.msra.mxu0 0.0
  %827 = vmatpush.msra.mxu0 0.0
  %828 = vmatpush.msra.mxu0 0.0
  %829 = vmatpush.msra.mxu0 0.0
  %830 = vmatpush.msra.mxu0 0.0
  %831 = vmatpush.msra.mxu0 %v35
  %832 = vmatpush.msra.mxu0 %v34
  %833 = vmatpush.msra.mxu0 %v33
  %834 = vmatpush.msra.mxu0 %v32
  %835 = vmatmul.f32.gmra.mxu0 %v817
  %v836 = vpop.f32.mrf.mxu0
  %v837 = vadd.f32 0.0, %v836
  %838 = vdwg.mxu0
  %v839 = vadd.f32 %v816, %v837
  %v840 = vadd.f32 %v839, %v84
  %v841 = vxor.u32 %v840, 2147483648
  %v842 = vmul.f32 %v841, 1.442695
  %v843 = vpow.pop %v842
  %v844 = vadd.f32 %v843, 1.0
  %v845 = vrcp.pop %v844
  %v846 = vmul.f32 %v844, %v845
  %v847 = vsub.f32 1.0, %v846
  %v848 = vmul.f32 %v845, %v847
  %v849 = vadd.f32 %v845, %v848
  %vm850 = vweird.f32 %v844
  %vm851 = vweird.f32 %v845
  %vm852 = vmor %vm850, %vm851
  %v853 = vsel %vm852, %v845, %v849
  %v854 = vand.u32 2147483647, %v844
  %vm855 = vcmp.eq.f32.partialorder %v854, 8.507059e+37
  %v856 = vand.u32 %v844, 2147483648
  %v857 = vor.u32 1.1754944e-38, %v856
  %v858 = vsel %vm855, %v857, %v853
  %v859 = vmul.f32 1.0, %v858
  %v860 = vtanh.pop %v840
  %v861 = vmul.f32 %v859, %v722
  %863 = vrot.lane.b32.xlu0 %v860, 32
  %v864 = vpop.permute.xlu0 %863
  %v866 = vmul.f32 %v859, %v864
  %868 = vrot.lane.b32.xlu0 %v866, 32
  %v869 = vpop.permute.xlu0 %868
  %v871 = vadd.f32 %v861, %v869
  %v872 = vtanh.pop %v871
  %874 = vrot.lane.b32.xlu0 %v872, 32
  %v875 = vpop.permute.xlu0 %874
  %v877 = vmul.f32 %v859, %v875
  %879 = vrot.lane.b32.xlu0 %v877, 64
  %v880 = vpop.permute.xlu0 %879
  %883 = vrot.lane.b32.xlu0 %v797, 96
  %v884 = vpop.permute.xlu0 %883
  %v886 = vsel %vm58, %v880, %v884
  %v888 = vsel %vm132, %v886, 0
  %890 = vmatpush.msra.mxu0 0.0
  %891 = vmatpush.msra.mxu0 0.0
  %892 = vmatpush.msra.mxu0 0.0
  %893 = vmatpush.msra.mxu0 0.0
  %894 = vmatpush.msra.mxu0 0.0
  %895 = vmatpush.msra.mxu0 0.0
  %896 = vmatpush.msra.mxu0 0.0
  %897 = vmatpush.msra.mxu0 0.0
  %898 = vmatpush.msra.mxu0 %v44
  %899 = vmatpush.msra.mxu0 %v43
  %900 = vmatpush.msra.mxu0 %v42
  %901 = vmatpush.msra.mxu0 %v41
  %902 = vmatpush.msra.mxu0 %v40
  %903 = vmatpush.msra.mxu0 %v39
  %904 = vmatpush.msra.mxu0 %v38
  %905 = vmatpush.msra.mxu0 %v37
  %906 = vmatmul.f32.gmra.mxu0 %v888
  %v907 = vpop.f32.mrf.mxu0
  %v908 = vadd.f32 %v130, %v907
  %909 = vdwg.mxu0
  %v910 = vxor.u32 %v908, 2147483648
  %v911 = vmul.f32 %v910, 1.442695
  %v912 = vpow.pop %v911
  %v913 = vadd.f32 %v912, 1.0
  %v914 = vrcp.pop %v913
  %v915 = vmul.f32 %v913, %v914
  %v916 = vsub.f32 1.0, %v915
  %v917 = vmul.f32 %v914, %v916
  %v918 = vadd.f32 %v914, %v917
  %vm919 = vweird.f32 %v913
  %vm920 = vweird.f32 %v914
  %vm921 = vmor %vm919, %vm920
  %v922 = vsel %vm921, %v914, %v918
  %v923 = vand.u32 2147483647, %v913
  %vm924 = vcmp.eq.f32.partialorder %v923, 8.507059e+37
  %v925 = vand.u32 %v913, 2147483648
  %v926 = vor.u32 1.1754944e-38, %v925
  %v927 = vsel %vm924, %v926, %v922
  %v928 = vmul.f32 1.0, %v927
  %v929 = vtanh.pop %v908
  %v930 = vmul.f32 %v928, %v791
  %932 = vrot.lane.b32.xlu0 %v929, 32
  %v933 = vpop.permute.xlu0 %932
  %v935 = vmul.f32 %v928, %v933
  %937 = vrot.lane.b32.xlu0 %v935, 32
  %v938 = vpop.permute.xlu0 %937
  %v940 = vadd.f32 %v930, %v938
  %v941 = vtanh.pop %v940
  %943 = vrot.lane.b32.xlu0 %v941, 32
  %v944 = vpop.permute.xlu0 %943
  %v946 = vmul.f32 %v928, %v944
  %v947 = vmul.f32 %v946, %v196
  %949 = vrot.lane.b32.xlu0 %v947, 64
  %v950 = vpop.permute.xlu0 %949
  %v952 = vsel %vm203, %v950, 0.0
  %953 = vadd.xlane.f32.xlu0 %v952
  %v954 = vpop.xlane.xlu0 %953
  %v955 = vadd.f32 %v954, %v208
  %s956 = scalar_lea.vmem %s8, 10
  %957 = vst.msk [vmem:[%s956] sm:$0x3] %vm211, %v955
  %s958 = scalar_lea.vmem %s0, 12
  %v959 = vld [vmem:[%s958] sm:$0x3]
  %961 = vset.pattern.permute.xlu0 0
  %962 = vperm.xlu0 %961, %v959
  %v963 = vpop.permute.xlu0 %962
  %v965 = vmul.f32 %v963, %v55
  %v966 = vsel %vm58, %v880, 0
  %968 = vmatpush.msra.mxu0 0.0
  %969 = vmatpush.msra.mxu0 0.0
  %970 = vmatpush.msra.mxu0 0.0
  %971 = vmatpush.msra.mxu0 0.0
  %972 = vmatpush.msra.mxu0 0.0
  %973 = vmatpush.msra.mxu0 0.0
  %974 = vmatpush.msra.mxu0 0.0
  %975 = vmatpush.msra.mxu0 0.0
  %976 = vmatpush.msra.mxu0 0.0
  %977 = vmatpush.msra.mxu0 0.0
  %978 = vmatpush.msra.mxu0 0.0
  %979 = vmatpush.msra.mxu0 0.0
  %980 = vmatpush.msra.mxu0 %v35
  %981 = vmatpush.msra.mxu0 %v34
  %982 = vmatpush.msra.mxu0 %v33
  %983 = vmatpush.msra.mxu0 %v32
  %984 = vmatmul.f32.gmra.mxu0 %v966
  %v985 = vpop.f32.mrf.mxu0
  %v986 = vadd.f32 0.0, %v985
  %987 = vdwg.mxu0
  %v988 = vadd.f32 %v965, %v986
  %v989 = vadd.f32 %v988, %v84
  %v990 = vxor.u32 %v989, 2147483648
  %v991 = vmul.f32 %v990, 1.442695
  %v992 = vpow.pop %v991
  %v993 = vadd.f32 %v992, 1.0
  %v994 = vrcp.pop %v993
  %v995 = vmul.f32 %v993, %v994
  %v996 = vsub.f32 1.0, %v995
  %v997 = vmul.f32 %v994, %v996
  %v998 = vadd.f32 %v994, %v997
  %vm999 = vweird.f32 %v993
  %vm1000 = vweird.f32 %v994
  %vm1001 = vmor %vm999, %vm1000
  %v1002 = vsel %vm1001, %v994, %v998
  %v1003 = vand.u32 2147483647, %v993
  %vm1004 = vcmp.eq.f32.partialorder %v1003, 8.507059e+37
  %v1005 = vand.u32 %v993, 2147483648
  %v1006 = vor.u32 1.1754944e-38, %v1005
  %v1007 = vsel %vm1004, %v1006, %v1002
  %v1008 = vmul.f32 1.0, %v1007
  %v1009 = vtanh.pop %v989
  %v1010 = vmul.f32 %v1008, %v871
  %1012 = vrot.lane.b32.xlu0 %v1009, 32
  %v1013 = vpop.permute.xlu0 %1012
  %v1015 = vmul.f32 %v1008, %v1013
  %1017 = vrot.lane.b32.xlu0 %v1015, 32
  %v1018 = vpop.permute.xlu0 %1017
  %v1020 = vadd.f32 %v1010, %v1018
  %v1021 = vtanh.pop %v1020
  %1023 = vrot.lane.b32.xlu0 %v1021, 32
  %v1024 = vpop.permute.xlu0 %1023
  %v1026 = vmul.f32 %v1008, %v1024
  %1028 = vrot.lane.b32.xlu0 %v1026, 64
  %v1029 = vpop.permute.xlu0 %1028
  %1032 = vrot.lane.b32.xlu0 %v946, 96
  %v1033 = vpop.permute.xlu0 %1032
  %v1035 = vsel %vm58, %v1029, %v1033
  %v1037 = vsel %vm132, %v1035, 0
  %1039 = vmatpush.msra.mxu0 0.0
  %1040 = vmatpush.msra.mxu0 0.0
  %1041 = vmatpush.msra.mxu0 0.0
  %1042 = vmatpush.msra.mxu0 0.0
  %1043 = vmatpush.msra.mxu0 0.0
  %1044 = vmatpush.msra.mxu0 0.0
  %1045 = vmatpush.msra.mxu0 0.0
  %1046 = vmatpush.msra.mxu0 0.0
  %1047 = vmatpush.msra.mxu0 %v44
  %1048 = vmatpush.msra.mxu0 %v43
  %1049 = vmatpush.msra.mxu0 %v42
  %1050 = vmatpush.msra.mxu0 %v41
  %1051 = vmatpush.msra.mxu0 %v40
  %1052 = vmatpush.msra.mxu0 %v39
  %1053 = vmatpush.msra.mxu0 %v38
  %1054 = vmatpush.msra.mxu0 %v37
  %1055 = vmatmul.f32.gmra.mxu0 %v1037
  %v1056 = vpop.f32.mrf.mxu0
  %v1057 = vadd.f32 %v130, %v1056
  %1058 = vdwg.mxu0
  %v1059 = vxor.u32 %v1057, 2147483648
  %v1060 = vmul.f32 %v1059, 1.442695
  %v1061 = vpow.pop %v1060
  %v1062 = vadd.f32 %v1061, 1.0
  %v1063 = vrcp.pop %v1062
  %v1064 = vmul.f32 %v1062, %v1063
  %v1065 = vsub.f32 1.0, %v1064
  %v1066 = vmul.f32 %v1063, %v1065
  %v1067 = vadd.f32 %v1063, %v1066
  %vm1068 = vweird.f32 %v1062
  %vm1069 = vweird.f32 %v1063
  %vm1070 = vmor %vm1068, %vm1069
  %v1071 = vsel %vm1070, %v1063, %v1067
  %v1072 = vand.u32 2147483647, %v1062
  %vm1073 = vcmp.eq.f32.partialorder %v1072, 8.507059e+37
  %v1074 = vand.u32 %v1062, 2147483648
  %v1075 = vor.u32 1.1754944e-38, %v1074
  %v1076 = vsel %vm1073, %v1075, %v1071
  %v1077 = vmul.f32 1.0, %v1076
  %v1078 = vtanh.pop %v1057
  %v1079 = vmul.f32 %v1077, %v940
  %1081 = vrot.lane.b32.xlu0 %v1078, 32
  %v1082 = vpop.permute.xlu0 %1081
  %v1084 = vmul.f32 %v1077, %v1082
  %1086 = vrot.lane.b32.xlu0 %v1084, 32
  %v1087 = vpop.permute.xlu0 %1086
  %v1089 = vadd.f32 %v1079, %v1087
  %v1090 = vtanh.pop %v1089
  %1092 = vrot.lane.b32.xlu0 %v1090, 32
  %v1093 = vpop.permute.xlu0 %1092
  %v1095 = vmul.f32 %v1077, %v1093
  %v1096 = vmul.f32 %v1095, %v196
  %1098 = vrot.lane.b32.xlu0 %v1096, 64
  %v1099 = vpop.permute.xlu0 %1098
  %v1101 = vsel %vm203, %v1099, 0.0
  %1102 = vadd.xlane.f32.xlu0 %v1101
  %v1103 = vpop.xlane.xlu0 %1102
  %v1104 = vadd.f32 %v1103, %v208
  %s1105 = scalar_lea.vmem %s8, 12
  %1106 = vst.msk [vmem:[%s1105] sm:$0x3] %vm211, %v1104
  %s1107 = scalar_lea.vmem %s0, 14
  %v1108 = vld [vmem:[%s1107] sm:$0x3]
  %1110 = vset.pattern.permute.xlu0 0
  %1111 = vperm.xlu0 %1110, %v1108
  %v1112 = vpop.permute.xlu0 %1111
  %v1114 = vmul.f32 %v1112, %v55
  %v1115 = vsel %vm58, %v1029, 0
  %1117 = vmatpush.msra.mxu0 0.0
  %1118 = vmatpush.msra.mxu0 0.0
  %1119 = vmatpush.msra.mxu0 0.0
  %1120 = vmatpush.msra.mxu0 0.0
  %1121 = vmatpush.msra.mxu0 0.0
  %1122 = vmatpush.msra.mxu0 0.0
  %1123 = vmatpush.msra.mxu0 0.0
  %1124 = vmatpush.msra.mxu0 0.0
  %1125 = vmatpush.msra.mxu0 0.0
  %1126 = vmatpush.msra.mxu0 0.0
  %1127 = vmatpush.msra.mxu0 0.0
  %1128 = vmatpush.msra.mxu0 0.0
  %1129 = vmatpush.msra.mxu0 %v35
  %1130 = vmatpush.msra.mxu0 %v34
  %1131 = vmatpush.msra.mxu0 %v33
  %1132 = vmatpush.msra.mxu0 %v32
  %1133 = vmatmul.f32.gmra.mxu0 %v1115
  %v1134 = vpop.f32.mrf.mxu0
  %v1135 = vadd.f32 0.0, %v1134
  %1136 = vdwg.mxu0
  %v1137 = vadd.f32 %v1114, %v1135
  %v1138 = vadd.f32 %v1137, %v84
  %v1139 = vxor.u32 %v1138, 2147483648
  %v1140 = vmul.f32 %v1139, 1.442695
  %v1141 = vpow.pop %v1140
  %v1142 = vadd.f32 %v1141, 1.0
  %v1143 = vrcp.pop %v1142
  %v1144 = vmul.f32 %v1142, %v1143
  %v1145 = vsub.f32 1.0, %v1144
  %v1146 = vmul.f32 %v1143, %v1145
  %v1147 = vadd.f32 %v1143, %v1146
  %vm1148 = vweird.f32 %v1142
  %vm1149 = vweird.f32 %v1143
  %vm1150 = vmor %vm1148, %vm1149
  %v1151 = vsel %vm1150, %v1143, %v1147
  %v1152 = vand.u32 2147483647, %v1142
  %vm1153 = vcmp.eq.f32.partialorder %v1152, 8.507059e+37
  %v1154 = vand.u32 %v1142, 2147483648
  %v1155 = vor.u32 1.1754944e-38, %v1154
  %v1156 = vsel %vm1153, %v1155, %v1151
  %v1157 = vmul.f32 1.0, %v1156
  %v1158 = vtanh.pop %v1138
  %v1159 = vmul.f32 %v1157, %v1020
  %1161 = vrot.lane.b32.xlu0 %v1158, 32
  %v1162 = vpop.permute.xlu0 %1161
  %v1164 = vmul.f32 %v1157, %v1162
  %1166 = vrot.lane.b32.xlu0 %v1164, 32
  %v1167 = vpop.permute.xlu0 %1166
  %v1169 = vadd.f32 %v1159, %v1167
  %v1170 = vtanh.pop %v1169
  %1172 = vrot.lane.b32.xlu0 %v1170, 32
  %v1173 = vpop.permute.xlu0 %1172
  %v1175 = vmul.f32 %v1157, %v1173
  %1177 = vrot.lane.b32.xlu0 %v1175, 64
  %v1178 = vpop.permute.xlu0 %1177
  %1181 = vrot.lane.b32.xlu0 %v1095, 96
  %v1182 = vpop.permute.xlu0 %1181
  %v1184 = vsel %vm58, %v1178, %v1182
  %v1186 = vsel %vm132, %v1184, 0
  %1188 = vmatpush.msra.mxu0 0.0
  %1189 = vmatpush.msra.mxu0 0.0
  %1190 = vmatpush.msra.mxu0 0.0
  %1191 = vmatpush.msra.mxu0 0.0
  %1192 = vmatpush.msra.mxu0 0.0
  %1193 = vmatpush.msra.mxu0 0.0
  %1194 = vmatpush.msra.mxu0 0.0
  %1195 = vmatpush.msra.mxu0 0.0
  %1196 = vmatpush.msra.mxu0 %v44
  %1197 = vmatpush.msra.mxu0 %v43
  %1198 = vmatpush.msra.mxu0 %v42
  %1199 = vmatpush.msra.mxu0 %v41
  %1200 = vmatpush.msra.mxu0 %v40
  %1201 = vmatpush.msra.mxu0 %v39
  %1202 = vmatpush.msra.mxu0 %v38
  %1203 = vmatpush.msra.mxu0 %v37
  %1204 = vmatmul.f32.gmra.mxu0 %v1186
  %v1205 = vpop.f32.mrf.mxu0
  %v1206 = vadd.f32 %v130, %v1205
  %1207 = vdwg.mxu0
  %v1208 = vxor.u32 %v1206, 2147483648
  %v1209 = vmul.f32 %v1208, 1.442695
  %v1210 = vpow.pop %v1209
  %v1211 = vadd.f32 %v1210, 1.0
  %v1212 = vrcp.pop %v1211
  %v1213 = vmul.f32 %v1211, %v1212
  %v1214 = vsub.f32 1.0, %v1213
  %v1215 = vmul.f32 %v1212, %v1214
  %v1216 = vadd.f32 %v1212, %v1215
  %vm1217 = vweird.f32 %v1211
  %vm1218 = vweird.f32 %v1212
  %vm1219 = vmor %vm1217, %vm1218
  %v1220 = vsel %vm1219, %v1212, %v1216
  %v1221 = vand.u32 2147483647, %v1211
  %vm1222 = vcmp.eq.f32.partialorder %v1221, 8.507059e+37
  %v1223 = vand.u32 %v1211, 2147483648
  %v1224 = vor.u32 1.1754944e-38, %v1223
  %v1225 = vsel %vm1222, %v1224, %v1220
  %v1226 = vmul.f32 1.0, %v1225
  %v1227 = vtanh.pop %v1206
  %v1228 = vmul.f32 %v1226, %v1089
  %1230 = vrot.lane.b32.xlu0 %v1227, 32
  %v1231 = vpop.permute.xlu0 %1230
  %v1233 = vmul.f32 %v1226, %v1231
  %1235 = vrot.lane.b32.xlu0 %v1233, 32
  %v1236 = vpop.permute.xlu0 %1235
  %v1238 = vadd.f32 %v1228, %v1236
  %v1239 = vtanh.pop %v1238
  %1241 = vrot.lane.b32.xlu0 %v1239, 32
  %v1242 = vpop.permute.xlu0 %1241
  %v1244 = vmul.f32 %v1226, %v1242
  %v1245 = vmul.f32 %v1244, %v196
  %1247 = vrot.lane.b32.xlu0 %v1245, 64
  %v1248 = vpop.permute.xlu0 %1247
  %v1250 = vsel %vm203, %v1248, 0.0
  %1251 = vadd.xlane.f32.xlu0 %v1250
  %v1252 = vpop.xlane.xlu0 %1251
  %v1253 = vadd.f32 %v1252, %v208
  %s1254 = scalar_lea.vmem %s8, 14
  %1255 = vst.msk [vmem:[%s1254] sm:$0x3] %vm211, %v1253
  %1257 = vset.pattern.permute.xlu0 0
  %1258 = vperm.xlu0 %1257, %v1253
  %v1259 = vpop.permute.xlu0 %1258
  %v1261 = vmul.f32 %v1259, %v55
  %v1262 = vsel %vm58, %v1178, 0
  %1264 = vmatpush.msra.mxu0 0.0
  %1265 = vmatpush.msra.mxu0 0.0
  %1266 = vmatpush.msra.mxu0 0.0
  %1267 = vmatpush.msra.mxu0 0.0
  %1268 = vmatpush.msra.mxu0 0.0
  %1269 = vmatpush.msra.mxu0 0.0
  %1270 = vmatpush.msra.mxu0 0.0
  %1271 = vmatpush.msra.mxu0 0.0
  %1272 = vmatpush.msra.mxu0 0.0
  %1273 = vmatpush.msra.mxu0 0.0
  %1274 = vmatpush.msra.mxu0 0.0
  %1275 = vmatpush.msra.mxu0 0.0
  %1276 = vmatpush.msra.mxu0 %v35
  %1277 = vmatpush.msra.mxu0 %v34
  %1278 = vmatpush.msra.mxu0 %v33
  %1279 = vmatpush.msra.mxu0 %v32
  %1280 = vmatmul.f32.gmra.mxu0 %v1262
  %v1281 = vpop.f32.mrf.mxu0
  %v1282 = vadd.f32 0.0, %v1281
  %1283 = vdwg.mxu0
  %v1284 = vadd.f32 %v1261, %v1282
  %v1285 = vadd.f32 %v1284, %v84
  %v1286 = vxor.u32 %v1285, 2147483648
  %v1287 = vmul.f32 %v1286, 1.442695
  %v1288 = vpow.pop %v1287
  %v1289 = vadd.f32 %v1288, 1.0
  %v1290 = vrcp.pop %v1289
  %v1291 = vmul.f32 %v1289, %v1290
  %v1292 = vsub.f32 1.0, %v1291
  %v1293 = vmul.f32 %v1290, %v1292
  %v1294 = vadd.f32 %v1290, %v1293
  %vm1295 = vweird.f32 %v1289
  %vm1296 = vweird.f32 %v1290
  %vm1297 = vmor %vm1295, %vm1296
  %v1298 = vsel %vm1297, %v1290, %v1294
  %v1299 = vand.u32 2147483647, %v1289
  %vm1300 = vcmp.eq.f32.partialorder %v1299, 8.507059e+37
  %v1301 = vand.u32 %v1289, 2147483648
  %v1302 = vor.u32 1.1754944e-38, %v1301
  %v1303 = vsel %vm1300, %v1302, %v1298
  %v1304 = vmul.f32 1.0, %v1303
  %v1305 = vtanh.pop %v1285
  %v1306 = vmul.f32 %v1304, %v1169
  %1308 = vrot.lane.b32.xlu0 %v1305, 32
  %v1309 = vpop.permute.xlu0 %1308
  %v1311 = vmul.f32 %v1304, %v1309
  %1313 = vrot.lane.b32.xlu0 %v1311, 32
  %v1314 = vpop.permute.xlu0 %1313
  %v1316 = vadd.f32 %v1306, %v1314
  %v1317 = vtanh.pop %v1316
  %1319 = vrot.lane.b32.xlu0 %v1317, 32
  %v1320 = vpop.permute.xlu0 %1319
  %v1322 = vmul.f32 %v1304, %v1320
  %1324 = vrot.lane.b32.xlu0 %v1322, 64
  %v1325 = vpop.permute.xlu0 %1324
  %1328 = vrot.lane.b32.xlu0 %v1244, 96
  %v1329 = vpop.permute.xlu0 %1328
  %v1331 = vsel %vm58, %v1325, %v1329
  %v1333 = vsel %vm132, %v1331, 0
  %1335 = vmatpush.msra.mxu0 0.0
  %1336 = vmatpush.msra.mxu0 0.0
  %1337 = vmatpush.msra.mxu0 0.0
  %1338 = vmatpush.msra.mxu0 0.0
  %1339 = vmatpush.msra.mxu0 0.0
  %1340 = vmatpush.msra.mxu0 0.0
  %1341 = vmatpush.msra.mxu0 0.0
  %1342 = vmatpush.msra.mxu0 0.0
  %1343 = vmatpush.msra.mxu0 %v44
  %1344 = vmatpush.msra.mxu0 %v43
  %1345 = vmatpush.msra.mxu0 %v42
  %1346 = vmatpush.msra.mxu0 %v41
  %1347 = vmatpush.msra.mxu0 %v40
  %1348 = vmatpush.msra.mxu0 %v39
  %1349 = vmatpush.msra.mxu0 %v38
  %1350 = vmatpush.msra.mxu0 %v37
  %1351 = vmatmul.f32.gmra.mxu0 %v1333
  %v1352 = vpop.f32.mrf.mxu0
  %v1353 = vadd.f32 %v130, %v1352
  %1354 = vdwg.mxu0
  %v1355 = vxor.u32 %v1353, 2147483648
  %v1356 = vmul.f32 %v1355, 1.442695
  %v1357 = vpow.pop %v1356
  %v1358 = vadd.f32 %v1357, 1.0
  %v1359 = vrcp.pop %v1358
  %v1360 = vmul.f32 %v1358, %v1359
  %v1361 = vsub.f32 1.0, %v1360
  %v1362 = vmul.f32 %v1359, %v1361
  %v1363 = vadd.f32 %v1359, %v1362
  %vm1364 = vweird.f32 %v1358
  %vm1365 = vweird.f32 %v1359
  %vm1366 = vmor %vm1364, %vm1365
  %v1367 = vsel %vm1366, %v1359, %v1363
  %v1368 = vand.u32 2147483647, %v1358
  %vm1369 = vcmp.eq.f32.partialorder %v1368, 8.507059e+37
  %v1370 = vand.u32 %v1358, 2147483648
  %v1371 = vor.u32 1.1754944e-38, %v1370
  %v1372 = vsel %vm1369, %v1371, %v1367
  %v1373 = vmul.f32 1.0, %v1372
  %v1374 = vtanh.pop %v1353
  %v1375 = vmul.f32 %v1373, %v1238
  %1377 = vrot.lane.b32.xlu0 %v1374, 32
  %v1378 = vpop.permute.xlu0 %1377
  %v1380 = vmul.f32 %v1373, %v1378
  %1382 = vrot.lane.b32.xlu0 %v1380, 32
  %v1383 = vpop.permute.xlu0 %1382
  %v1385 = vadd.f32 %v1375, %v1383
  %v1386 = vtanh.pop %v1385
  %1388 = vrot.lane.b32.xlu0 %v1386, 32
  %v1389 = vpop.permute.xlu0 %1388
  %v1391 = vmul.f32 %v1373, %v1389
  %v1392 = vmul.f32 %v1391, %v196
  %1394 = vrot.lane.b32.xlu0 %v1392, 64
  %v1395 = vpop.permute.xlu0 %1394
  %v1397 = vsel %vm203, %v1395, 0.0
  %1398 = vadd.xlane.f32.xlu0 %v1397
  %v1399 = vpop.xlane.xlu0 %1398
  %v1400 = vadd.f32 %v1399, %v208
  %s1401 = scalar_lea.vmem %s8, 16
  %1402 = vst.msk [vmem:[%s1401] sm:$0x3] %vm211, %v1400
  %1404 = vset.pattern.permute.xlu0 0
  %1405 = vperm.xlu0 %1404, %v1400
  %v1406 = vpop.permute.xlu0 %1405
  %v1408 = vmul.f32 %v1406, %v55
  %v1409 = vsel %vm58, %v1325, 0
  %1411 = vmatpush.msra.mxu0 0.0
  %1412 = vmatpush.msra.mxu0 0.0
  %1413 = vmatpush.msra.mxu0 0.0
  %1414 = vmatpush.msra.mxu0 0.0
  %1415 = vmatpush.msra.mxu0 0.0
  %1416 = vmatpush.msra.mxu0 0.0
  %1417 = vmatpush.msra.mxu0 0.0
  %1418 = vmatpush.msra.mxu0 0.0
  %1419 = vmatpush.msra.mxu0 0.0
  %1420 = vmatpush.msra.mxu0 0.0
  %1421 = vmatpush.msra.mxu0 0.0
  %1422 = vmatpush.msra.mxu0 0.0
  %1423 = vmatpush.msra.mxu0 %v35
  %1424 = vmatpush.msra.mxu0 %v34
  %1425 = vmatpush.msra.mxu0 %v33
  %1426 = vmatpush.msra.mxu0 %v32
  %1427 = vmatmul.f32.gmra.mxu0 %v1409
  %v1428 = vpop.f32.mrf.mxu0
  %v1429 = vadd.f32 0.0, %v1428
  %1430 = vdwg.mxu0
  %v1431 = vadd.f32 %v1408, %v1429
  %v1432 = vadd.f32 %v1431, %v84
  %v1433 = vxor.u32 %v1432, 2147483648
  %v1434 = vmul.f32 %v1433, 1.442695
  %v1435 = vpow.pop %v1434
  %v1436 = vadd.f32 %v1435, 1.0
  %v1437 = vrcp.pop %v1436
  %v1438 = vmul.f32 %v1436, %v1437
  %v1439 = vsub.f32 1.0, %v1438
  %v1440 = vmul.f32 %v1437, %v1439
  %v1441 = vadd.f32 %v1437, %v1440
  %vm1442 = vweird.f32 %v1436
  %vm1443 = vweird.f32 %v1437
  %vm1444 = vmor %vm1442, %vm1443
  %v1445 = vsel %vm1444, %v1437, %v1441
  %v1446 = vand.u32 2147483647, %v1436
  %vm1447 = vcmp.eq.f32.partialorder %v1446, 8.507059e+37
  %v1448 = vand.u32 %v1436, 2147483648
  %v1449 = vor.u32 1.1754944e-38, %v1448
  %v1450 = vsel %vm1447, %v1449, %v1445
  %v1451 = vmul.f32 1.0, %v1450
  %v1452 = vtanh.pop %v1432
  %v1453 = vmul.f32 %v1451, %v1316
  %1455 = vrot.lane.b32.xlu0 %v1452, 32
  %v1456 = vpop.permute.xlu0 %1455
  %v1458 = vmul.f32 %v1451, %v1456
  %1460 = vrot.lane.b32.xlu0 %v1458, 32
  %v1461 = vpop.permute.xlu0 %1460
  %v1463 = vadd.f32 %v1453, %v1461
  %v1464 = vtanh.pop %v1463
  %1466 = vrot.lane.b32.xlu0 %v1464, 32
  %v1467 = vpop.permute.xlu0 %1466
  %v1469 = vmul.f32 %v1451, %v1467
  %1471 = vrot.lane.b32.xlu0 %v1469, 64
  %v1472 = vpop.permute.xlu0 %1471
  %1475 = vrot.lane.b32.xlu0 %v1391, 96
  %v1476 = vpop.permute.xlu0 %1475
  %v1478 = vsel %vm58, %v1472, %v1476
  %v1480 = vsel %vm132, %v1478, 0
  %1482 = vmatpush.msra.mxu0 0.0
  %1483 = vmatpush.msra.mxu0 0.0
  %1484 = vmatpush.msra.mxu0 0.0
  %1485 = vmatpush.msra.mxu0 0.0
  %1486 = vmatpush.msra.mxu0 0.0
  %1487 = vmatpush.msra.mxu0 0.0
  %1488 = vmatpush.msra.mxu0 0.0
  %1489 = vmatpush.msra.mxu0 0.0
  %1490 = vmatpush.msra.mxu0 %v44
  %1491 = vmatpush.msra.mxu0 %v43
  %1492 = vmatpush.msra.mxu0 %v42
  %1493 = vmatpush.msra.mxu0 %v41
  %1494 = vmatpush.msra.mxu0 %v40
  %1495 = vmatpush.msra.mxu0 %v39
  %1496 = vmatpush.msra.mxu0 %v38
  %1497 = vmatpush.msra.mxu0 %v37
  %1498 = vmatmul.f32.gmra.mxu0 %v1480
  %v1499 = vpop.f32.mrf.mxu0
  %v1500 = vadd.f32 %v130, %v1499
  %1501 = vdwg.mxu0
  %v1502 = vxor.u32 %v1500, 2147483648
  %v1503 = vmul.f32 %v1502, 1.442695
  %v1504 = vpow.pop %v1503
  %v1505 = vadd.f32 %v1504, 1.0
  %v1506 = vrcp.pop %v1505
  %v1507 = vmul.f32 %v1505, %v1506
  %v1508 = vsub.f32 1.0, %v1507
  %v1509 = vmul.f32 %v1506, %v1508
  %v1510 = vadd.f32 %v1506, %v1509
  %vm1511 = vweird.f32 %v1505
  %vm1512 = vweird.f32 %v1506
  %vm1513 = vmor %vm1511, %vm1512
  %v1514 = vsel %vm1513, %v1506, %v1510
  %v1515 = vand.u32 2147483647, %v1505
  %vm1516 = vcmp.eq.f32.partialorder %v1515, 8.507059e+37
  %v1517 = vand.u32 %v1505, 2147483648
  %v1518 = vor.u32 1.1754944e-38, %v1517
  %v1519 = vsel %vm1516, %v1518, %v1514
  %v1520 = vmul.f32 1.0, %v1519
  %v1521 = vtanh.pop %v1500
  %v1522 = vmul.f32 %v1520, %v1385
  %1524 = vrot.lane.b32.xlu0 %v1521, 32
  %v1525 = vpop.permute.xlu0 %1524
  %v1527 = vmul.f32 %v1520, %v1525
  %1529 = vrot.lane.b32.xlu0 %v1527, 32
  %v1530 = vpop.permute.xlu0 %1529
  %v1532 = vadd.f32 %v1522, %v1530
  %v1533 = vtanh.pop %v1532
  %1535 = vrot.lane.b32.xlu0 %v1533, 32
  %v1536 = vpop.permute.xlu0 %1535
  %v1538 = vmul.f32 %v1520, %v1536
  %v1539 = vmul.f32 %v1538, %v196
  %1541 = vrot.lane.b32.xlu0 %v1539, 64
  %v1542 = vpop.permute.xlu0 %1541
  %v1544 = vsel %vm203, %v1542, 0.0
  %1545 = vadd.xlane.f32.xlu0 %v1544
  %v1546 = vpop.xlane.xlu0 %1545
  %v1547 = vadd.f32 %v1546, %v208
  %s1548 = scalar_lea.vmem %s8, 18
  %1549 = vst.msk [vmem:[%s1548] sm:$0x3] %vm211, %v1547
  %1551 = vset.pattern.permute.xlu0 0
  %1552 = vperm.xlu0 %1551, %v1547
  %v1553 = vpop.permute.xlu0 %1552
  %v1555 = vmul.f32 %v1553, %v55
  %v1556 = vsel %vm58, %v1472, 0
  %1558 = vmatpush.msra.mxu0 0.0
  %1559 = vmatpush.msra.mxu0 0.0
  %1560 = vmatpush.msra.mxu0 0.0
  %1561 = vmatpush.msra.mxu0 0.0
  %1562 = vmatpush.msra.mxu0 0.0
  %1563 = vmatpush.msra.mxu0 0.0
  %1564 = vmatpush.msra.mxu0 0.0
  %1565 = vmatpush.msra.mxu0 0.0
  %1566 = vmatpush.msra.mxu0 0.0
  %1567 = vmatpush.msra.mxu0 0.0
  %1568 = vmatpush.msra.mxu0 0.0
  %1569 = vmatpush.msra.mxu0 0.0
  %1570 = vmatpush.msra.mxu0 %v35
  %1571 = vmatpush.msra.mxu0 %v34
  %1572 = vmatpush.msra.mxu0 %v33
  %1573 = vmatpush.msra.mxu0 %v32
  %1574 = vmatmul.f32.gmra.mxu0 %v1556
  %v1575 = vpop.f32.mrf.mxu0
  %v1576 = vadd.f32 0.0, %v1575
  %1577 = vdwg.mxu0
  %v1578 = vadd.f32 %v1555, %v1576
  %v1579 = vadd.f32 %v1578, %v84
  %v1580 = vxor.u32 %v1579, 2147483648
  %v1581 = vmul.f32 %v1580, 1.442695
  %v1582 = vpow.pop %v1581
  %v1583 = vadd.f32 %v1582, 1.0
  %v1584 = vrcp.pop %v1583
  %v1585 = vmul.f32 %v1583, %v1584
  %v1586 = vsub.f32 1.0, %v1585
  %v1587 = vmul.f32 %v1584, %v1586
  %v1588 = vadd.f32 %v1584, %v1587
  %vm1589 = vweird.f32 %v1583
  %vm1590 = vweird.f32 %v1584
  %vm1591 = vmor %vm1589, %vm1590
  %v1592 = vsel %vm1591, %v1584, %v1588
  %v1593 = vand.u32 2147483647, %v1583
  %vm1594 = vcmp.eq.f32.partialorder %v1593, 8.507059e+37
  %v1595 = vand.u32 %v1583, 2147483648
  %v1596 = vor.u32 1.1754944e-38, %v1595
  %v1597 = vsel %vm1594, %v1596, %v1592
  %v1598 = vmul.f32 1.0, %v1597
  %v1599 = vtanh.pop %v1579
  %v1600 = vmul.f32 %v1598, %v1463
  %1602 = vrot.lane.b32.xlu0 %v1599, 32
  %v1603 = vpop.permute.xlu0 %1602
  %v1605 = vmul.f32 %v1598, %v1603
  %1607 = vrot.lane.b32.xlu0 %v1605, 32
  %v1608 = vpop.permute.xlu0 %1607
  %v1610 = vadd.f32 %v1600, %v1608
  %v1611 = vtanh.pop %v1610
  %1613 = vrot.lane.b32.xlu0 %v1611, 32
  %v1614 = vpop.permute.xlu0 %1613
  %v1616 = vmul.f32 %v1598, %v1614
  %1618 = vrot.lane.b32.xlu0 %v1616, 64
  %v1619 = vpop.permute.xlu0 %1618
  %1622 = vrot.lane.b32.xlu0 %v1538, 96
  %v1623 = vpop.permute.xlu0 %1622
  %v1625 = vsel %vm58, %v1619, %v1623
  %v1627 = vsel %vm132, %v1625, 0
  %1629 = vmatpush.msra.mxu0 0.0
  %1630 = vmatpush.msra.mxu0 0.0
  %1631 = vmatpush.msra.mxu0 0.0
  %1632 = vmatpush.msra.mxu0 0.0
  %1633 = vmatpush.msra.mxu0 0.0
  %1634 = vmatpush.msra.mxu0 0.0
  %1635 = vmatpush.msra.mxu0 0.0
  %1636 = vmatpush.msra.mxu0 0.0
  %1637 = vmatpush.msra.mxu0 %v44
  %1638 = vmatpush.msra.mxu0 %v43
  %1639 = vmatpush.msra.mxu0 %v42
  %1640 = vmatpush.msra.mxu0 %v41
  %1641 = vmatpush.msra.mxu0 %v40
  %1642 = vmatpush.msra.mxu0 %v39
  %1643 = vmatpush.msra.mxu0 %v38
  %1644 = vmatpush.msra.mxu0 %v37
  %1645 = vmatmul.f32.gmra.mxu0 %v1627
  %v1646 = vpop.f32.mrf.mxu0
  %v1647 = vadd.f32 %v130, %v1646
  %1648 = vdwg.mxu0
  %v1649 = vxor.u32 %v1647, 2147483648
  %v1650 = vmul.f32 %v1649, 1.442695
  %v1651 = vpow.pop %v1650
  %v1652 = vadd.f32 %v1651, 1.0
  %v1653 = vrcp.pop %v1652
  %v1654 = vmul.f32 %v1652, %v1653
  %v1655 = vsub.f32 1.0, %v1654
  %v1656 = vmul.f32 %v1653, %v1655
  %v1657 = vadd.f32 %v1653, %v1656
  %vm1658 = vweird.f32 %v1652
  %vm1659 = vweird.f32 %v1653
  %vm1660 = vmor %vm1658, %vm1659
  %v1661 = vsel %vm1660, %v1653, %v1657
  %v1662 = vand.u32 2147483647, %v1652
  %vm1663 = vcmp.eq.f32.partialorder %v1662, 8.507059e+37
  %v1664 = vand.u32 %v1652, 2147483648
  %v1665 = vor.u32 1.1754944e-38, %v1664
  %v1666 = vsel %vm1663, %v1665, %v1661
  %v1667 = vmul.f32 1.0, %v1666
  %v1668 = vtanh.pop %v1647
  %v1669 = vmul.f32 %v1667, %v1532
  %1671 = vrot.lane.b32.xlu0 %v1668, 32
  %v1672 = vpop.permute.xlu0 %1671
  %v1674 = vmul.f32 %v1667, %v1672
  %1676 = vrot.lane.b32.xlu0 %v1674, 32
  %v1677 = vpop.permute.xlu0 %1676
  %v1679 = vadd.f32 %v1669, %v1677
  %v1680 = vtanh.pop %v1679
  %1682 = vrot.lane.b32.xlu0 %v1680, 32
  %v1683 = vpop.permute.xlu0 %1682
  %v1685 = vmul.f32 %v1667, %v1683
  %v1686 = vmul.f32 %v1685, %v196
  %1688 = vrot.lane.b32.xlu0 %v1686, 64
  %v1689 = vpop.permute.xlu0 %1688
  %v1691 = vsel %vm203, %v1689, 0.0
  %1692 = vadd.xlane.f32.xlu0 %v1691
  %v1693 = vpop.xlane.xlu0 %1692
  %v1694 = vadd.f32 %v1693, %v208
  %s1695 = scalar_lea.vmem %s8, 20
  %1696 = vst.msk [vmem:[%s1695] sm:$0x3] %vm211, %v1694
  // Predicated region
  $region34: #{lstm_predictor.1} parent=0 // pred_check
    _
  $region35: #{lstm_predictor.1} parent=0 // pred_check_branch
    %1698 = sbr.rel (0) target = $region37
  $region36: #{lstm_predictor.1} parent=0 // pred_region
    _
  $region37: #{lstm_predictor.1} parent=0 // pred_fallthru
    _
  // Predicated region
  $region38: #{lstm_predictor.1} parent=0 // pred_check
    _
  $region39: #{lstm_predictor.1} parent=0 // pred_check_branch
    %1700 = sbr.rel (0) target = $region41
  $region40: #{lstm_predictor.1} parent=0 // pred_region
    _
  $region41: #{lstm_predictor.1} parent=0 // pred_fallthru
    _

</llo_original>
